<compile_context>
chip_gen: v7x
topology: tpu7x:2x2x1
jax: 0.10.0
libtpu: 0.0.40
codegen_flags: <defaults>
</compile_context>

<pallas_src>
import functools
import math

import jax
import jax.numpy as jnp
from jax.experimental import pallas as pl
from jax.experimental.pallas import tpu as pltpu

C_PAD = 128      # lane-dense feature width for every internal block
N_ALIGN = 128    # node-count alignment (A's lane axis / aggregation MXU K-dim)


# ----------------------------- Pallas kernel ---------------------------------

def _gnn3_kernel(a_ref, x_ref, w_ref, b_ref, o_ref):
    """Fused 3-layer NNConv stack, everything VMEM-resident.

    a_ref : bf16 [2*Np, Np]    stacked [A1; A0] adjacency
    x_ref : bf16 [Np, 128]     zero-padded input features
    w_ref : bf16 [3, 384, 128] per-layer [W0; B0; Root] (zero-padded)
    b_ref : f32  [3, 1, 128]   per-layer bias
    o_ref : bf16 [Np, 128]     padded output (wrapper slices real channels)
    """
    n = a_ref.shape[1]
    a = a_ref[...]                                                    # [2N, N] bf16

    def nnconv(x_bf16, layer, relu):
        # Merged neighbour aggregation: [A1; A0] @ x -> [h; g]  (one MXU pass, f32 acc).
        ax = jnp.dot(a, x_bf16, preferred_element_type=jnp.float32)   # [2N, C] f32
        ax_bf = ax.astype(jnp.bfloat16)                               # cast exactly once
        # Merged projection: [h | g | x] @ [W0; B0; Root] + bias  (bf16 concat, K=384).
        hgx = jnp.concatenate([ax_bf[:n], ax_bf[n:], x_bf16], axis=1)  # [N, 3C] bf16
        out = jnp.dot(hgx, w_ref[layer],
                      preferred_element_type=jnp.float32) + b_ref[layer]
        if relu:
            out = jnp.maximum(out, 0.0)
        return out.astype(jnp.bfloat16)

    h1 = nnconv(x_ref[...], 0, relu=True)    # NNConv(in, 128) + ReLU
    h2 = nnconv(h1, 1, relu=True)            # NNConv(128, 128) + ReLU
    o_ref[...] = nnconv(h2, 2, relu=False)   # NNConv(128, out) (padded)


def gnn_embeds_pallas(a_bf16, x_pad, w_stack, b_stack):
    """Single pallas_call running all three layers with everything VMEM-resident."""
    n_pad = x_pad.shape[0]

    a_bytes = a_bf16.size * a_bf16.dtype.itemsize
    w_bytes = w_stack.size * 2 + b_stack.size * 4
    act_bytes = 10 * n_pad * C_PAD * 4           # ax / hgx / activation scratch (rough)
    vmem_limit = int(min(64 << 20, max(32 << 20, a_bytes + w_bytes + act_bytes + (4 << 20))))

    flops = 3 * (2 * (2 * n_pad) * n_pad * C_PAD        # aggregation matmul
                 + 2 * n_pad * (3 * C_PAD) * C_PAD)     # merged projection matmul
    bytes_accessed = int(a_bytes + w_bytes + 2 * (n_pad * C_PAD * 2))

    vmem = pl.BlockSpec(memory_space=pltpu.MemorySpace.VMEM)
    return pl.pallas_call(
        _gnn3_kernel,
        out_shape=jax.ShapeDtypeStruct((n_pad, C_PAD), jnp.bfloat16),
        in_specs=[vmem] * 4,
        out_specs=vmem,
        compiler_params=pltpu.CompilerParams(vmem_limit_bytes=vmem_limit),
        cost_estimate=pl.CostEstimate(flops=flops, transcendentals=0,
                                      bytes_accessed=bytes_accessed),
    )(a_bf16, x_pad, w_stack, b_stack)


# ------------------------------ JAX glue --------------------------------------

def build_adjacency(edge_index, edge_attr, num_nodes_pad):
    """Stacked [2*Np, Np] adjacency built in one buffer with one scatter-add:
    rows 0..Np-1 = A1 (edge-attr weighted), rows Np..2Np-1 = A0 (edge counts).
    f32 accumulation, single cast to bf16 (fused by XLA with the scatter output)."""
    src = edge_index[0]
    tgt = edge_index[1]
    rows = jnp.concatenate([tgt, tgt + num_nodes_pad])
    cols = jnp.concatenate([src, src])
    vals = jnp.concatenate([edge_attr[:, 0], jnp.ones_like(edge_attr[:, 0])])
    a = jnp.zeros((2 * num_nodes_pad, num_nodes_pad), jnp.float32)
    a = a.at[rows, cols].add(vals)
    return a.astype(jnp.bfloat16)                                     # [2Np, Np] bf16


def _xavier_uniform(key, fan_in, fan_out, shape):
    bound = math.sqrt(6.0 / (fan_in + fan_out))
    return jax.random.uniform(key, shape, jnp.float32, -bound, bound)


def _init_nnconv_layer(key, c_in, c_out, *, c_in_pad=C_PAD, c_out_pad=C_PAD):
    """Mirror weights_init (xavier for >1-dim params, zeros else), then pre-combine
    W0/B0/Root into one [3*c_in_pad, c_out_pad] bf16 matrix and a [1, c_out_pad] f32 bias."""
    k_lin, k_root = jax.random.split(key)
    # nn = Linear(1, c_in*c_out): weight [c_in*c_out, 1] (xavier), bias zeros.
    lin_w = _xavier_uniform(k_lin, 1, c_in * c_out, (c_in * c_out, 1))
    lin_b = jnp.zeros((c_in * c_out,), jnp.float32)
    w0 = lin_w.reshape(c_in, c_out)     # row-major view(in, out) -> W_e = a_e*W0 + B0
    b0 = lin_b.reshape(c_in, c_out)
    root = _xavier_uniform(k_root, c_in, c_out, (c_in, c_out))
    bias = jnp.zeros((1, c_out), jnp.float32)

    pad_in, pad_out = c_in_pad - c_in, c_out_pad - c_out

    def pad(m):
        return jnp.pad(m, ((0, pad_in), (0, pad_out)))

    w_cat = jnp.concatenate([pad(w0), pad(b0), pad(root)], axis=0)    # [3*c_in_pad, c_out_pad]
    bias = jnp.pad(bias, ((0, 0), (0, pad_out)))
    return w_cat.astype(jnp.bfloat16), bias


def init_gnn_params(key, in_channels, hidden, out_channels):
    """Stack the 3 layers' merged weights/biases: w [3, 384, 128] bf16, b [3, 1, 128] f32."""
    k1, k2, k3 = jax.random.split(key, 3)
    l1 = _init_nnconv_layer(k1, in_channels, hidden)
    l2 = _init_nnconv_layer(k2, hidden, hidden)
    l3 = _init_nnconv_layer(k3, hidden, out_channels)
    return dict(w=jnp.stack([l1[0], l2[0], l3[0]]),
                b=jnp.stack([l1[1], l2[1], l3[1]]))


def gnn_embeds_forward(params, x, edge_index, edge_attr, *, out_channels):
    """Equivalent of GNNEmbeds.forward (batch vector unused, as in the reference)."""
    n, c_in = x.shape
    n_pad = max(N_ALIGN, ((n + N_ALIGN - 1) // N_ALIGN) * N_ALIGN)
    a = build_adjacency(edge_index, edge_attr, n_pad)                 # [2Np, Np] bf16
    x_pad = jnp.pad(x, ((0, n_pad - n), (0, C_PAD - c_in))).astype(jnp.bfloat16)
    out_pad = gnn_embeds_pallas(a, x_pad, params["w"], params["b"])   # [Np, 128] bf16
    return out_pad[:n, :out_channels].astype(jnp.float32)


# ------------------------------ main -------------------------------------------

if __name__ == "__main__":
    IN_CHANNELS = 4
    HIDDEN = 128
    OUT_CHANNELS = 16
    NUM_NODES = 16
    NUM_EDGES = 32

    key = jax.random.PRNGKey(0)
    k_x, k_src, k_tgt, k_attr, k_params = jax.random.split(key, 5)

    x = jax.random.normal(k_x, (NUM_NODES, IN_CHANNELS), jnp.float32)
    edge_index = jnp.stack([
        jax.random.randint(k_src, (NUM_EDGES,), 0, NUM_NODES),
        jax.random.randint(k_tgt, (NUM_EDGES,), 0, NUM_NODES),
    ])                                                    # [2, E]
    edge_attr = jax.random.uniform(k_attr, (NUM_EDGES, 1), jnp.float32)

    params = init_gnn_params(k_params, IN_CHANNELS, HIDDEN, OUT_CHANNELS)

    fwd = jax.jit(functools.partial(gnn_embeds_forward, out_channels=OUT_CHANNELS))
    out = fwd(params, x, edge_index, edge_attr)
    jax.block_until_ready(out)
    assert out.shape == (NUM_NODES, OUT_CHANNELS), out.shape
    print("KERNEL_OK")
</pallas_src>

<mosaic_0001>
module attributes {stable_mosaic.version = 11 : i64} {
  func.func private @main(%arg0: i32) attributes {dimension_semantics = [#tpu.dimension_semantics<core_parallel>], iteration_bounds = array<i64: 2>, tpu.core_type = #tpu.core_type<sc_scalar_subcore>, window_params = []} {
    return
  }
}

module attributes {stable_mosaic.version = 11 : i64} {
  func.func private @main(%arg0: i32) attributes {dimension_semantics = [#tpu.dimension_semantics<core_parallel>], iteration_bounds = array<i64: 2>, tpu.core_type = #tpu.core_type<sc_scalar_subcore>, window_params = []} {
    return
  }
}

module attributes {stable_mosaic.version = 11 : i64} {
  func.func @_gnn3_kernel(%arg0: memref<256x128xbf16, #tpu.memory_space<vmem>>, %arg1: memref<128x128xbf16, #tpu.memory_space<vmem>>, %arg2: memref<3x384x128xbf16, #tpu.memory_space<vmem>>, %arg3: memref<3x1x128xf32, #tpu.memory_space<vmem>>, %arg4: memref<128x128xbf16, #tpu.memory_space<vmem>>) attributes {dimension_semantics = [], scalar_prefetch = 0 : i64, scratch_operands = 0 : i64, tpu.core_type = #tpu.core_type<tc>} {
    %c0 = arith.constant 0 : index
    %c0_0 = arith.constant 0 : index
    %0 = vector.load %arg0[%c0, %c0_0] : memref<256x128xbf16, #tpu.memory_space<vmem>>, vector<256x128xbf16>
    %c0_1 = arith.constant 0 : index
    %c0_2 = arith.constant 0 : index
    %1 = vector.load %arg1[%c0_1, %c0_2] : memref<128x128xbf16, #tpu.memory_space<vmem>>, vector<128x128xbf16>
    %cst = arith.constant dense<0.000000e+00> : vector<256x128xf32>
    %2 = tpu.matmul %0, %1, %cst {dimension_numbers = #tpu.dot_dimension_numbers<[1], [0], [0], [1], [0, 0, 1, 1], [], []>} : vector<256x128xbf16>, vector<128x128xbf16>, vector<256x128xf32> -> vector<256x128xf32>
    %3 = arith.truncf %2 : vector<256x128xf32> to vector<256x128xbf16>
    %4 = vector.extract_strided_slice %3 {offsets = [0, 0], sizes = [128, 128], strides = [1, 1]} : vector<256x128xbf16> to vector<128x128xbf16>
    %5 = vector.extract_strided_slice %3 {offsets = [128, 0], sizes = [128, 128], strides = [1, 1]} : vector<256x128xbf16> to vector<128x128xbf16>
    %6 = tpu.concatenate %4, %5, %1 in 1 : vector<128x128xbf16>, vector<128x128xbf16>, vector<128x128xbf16> -> vector<128x384xbf16>
    %c0_3 = arith.constant 0 : index
    %c0_4 = arith.constant 0 : index
    %c0_5 = arith.constant 0 : index
    %7 = vector.load %arg2[%c0_3, %c0_4, %c0_5] : memref<3x384x128xbf16, #tpu.memory_space<vmem>>, vector<1x384x128xbf16>
    %8 = vector.shape_cast %7 : vector<1x384x128xbf16> to vector<384x128xbf16>
    %cst_6 = arith.constant dense<0.000000e+00> : vector<128x128xf32>
    %9 = tpu.matmul %6, %8, %cst_6 {dimension_numbers = #tpu.dot_dimension_numbers<[1], [0], [0], [1], [0, 0, 1, 1], [], []>} : vector<128x384xbf16>, vector<384x128xbf16>, vector<128x128xf32> -> vector<128x128xf32>
    %c0_7 = arith.constant 0 : index
    %c0_8 = arith.constant 0 : index
    %c0_9 = arith.constant 0 : index
    %10 = vector.load %arg3[%c0_7, %c0_8, %c0_9] : memref<3x1x128xf32, #tpu.memory_space<vmem>>, vector<1x1x128xf32>
    %11 = vector.shape_cast %10 : vector<1x1x128xf32> to vector<1x128xf32>
    %12 = vector.broadcast %11 : vector<1x128xf32> to vector<128x128xf32>
    %13 = arith.addf %9, %12 : vector<128x128xf32>
    %cst_10 = arith.constant 0.000000e+00 : f32
    %14 = vector.broadcast %cst_10 : f32 to vector<128x128xf32>
    %15 = arith.maximumf %13, %14 : vector<128x128xf32>
    %16 = arith.truncf %15 : vector<128x128xf32> to vector<128x128xbf16>
    %cst_11 = arith.constant dense<0.000000e+00> : vector<256x128xf32>
    %17 = tpu.matmul %0, %16, %cst_11 {dimension_numbers = #tpu.dot_dimension_numbers<[1], [0], [0], [1], [0, 0, 1, 1], [], []>} : vector<256x128xbf16>, vector<128x128xbf16>, vector<256x128xf32> -> vector<256x128xf32>
    %18 = arith.truncf %17 : vector<256x128xf32> to vector<256x128xbf16>
    %19 = vector.extract_strided_slice %18 {offsets = [0, 0], sizes = [128, 128], strides = [1, 1]} : vector<256x128xbf16> to vector<128x128xbf16>
    %20 = vector.extract_strided_slice %18 {offsets = [128, 0], sizes = [128, 128], strides = [1, 1]} : vector<256x128xbf16> to vector<128x128xbf16>
    %21 = tpu.concatenate %19, %20, %16 in 1 : vector<128x128xbf16>, vector<128x128xbf16>, vector<128x128xbf16> -> vector<128x384xbf16>
    %c1 = arith.constant 1 : index
    %c0_12 = arith.constant 0 : index
    %c0_13 = arith.constant 0 : index
    %22 = vector.load %arg2[%c1, %c0_12, %c0_13] : memref<3x384x128xbf16, #tpu.memory_space<vmem>>, vector<1x384x128xbf16>
    %23 = vector.shape_cast %22 : vector<1x384x128xbf16> to vector<384x128xbf16>
    %cst_14 = arith.constant dense<0.000000e+00> : vector<128x128xf32>
    %24 = tpu.matmul %21, %23, %cst_14 {dimension_numbers = #tpu.dot_dimension_numbers<[1], [0], [0], [1], [0, 0, 1, 1], [], []>} : vector<128x384xbf16>, vector<384x128xbf16>, vector<128x128xf32> -> vector<128x128xf32>
    %c1_15 = arith.constant 1 : index
    %c0_16 = arith.constant 0 : index
    %c0_17 = arith.constant 0 : index
    %25 = vector.load %arg3[%c1_15, %c0_16, %c0_17] : memref<3x1x128xf32, #tpu.memory_space<vmem>>, vector<1x1x128xf32>
    %26 = vector.shape_cast %25 : vector<1x1x128xf32> to vector<1x128xf32>
    %27 = vector.broadcast %26 : vector<1x128xf32> to vector<128x128xf32>
    %28 = arith.addf %24, %27 : vector<128x128xf32>
    %cst_18 = arith.constant 0.000000e+00 : f32
    %29 = vector.broadcast %cst_18 : f32 to vector<128x128xf32>
    %30 = arith.maximumf %28, %29 : vector<128x128xf32>
    %31 = arith.truncf %30 : vector<128x128xf32> to vector<128x128xbf16>
    %cst_19 = arith.constant dense<0.000000e+00> : vector<256x128xf32>
    %32 = tpu.matmul %0, %31, %cst_19 {dimension_numbers = #tpu.dot_dimension_numbers<[1], [0], [0], [1], [0, 0, 1, 1], [], []>} : vector<256x128xbf16>, vector<128x128xbf16>, vector<256x128xf32> -> vector<256x128xf32>
    %33 = arith.truncf %32 : vector<256x128xf32> to vector<256x128xbf16>
    %34 = vector.extract_strided_slice %33 {offsets = [0, 0], sizes = [128, 128], strides = [1, 1]} : vector<256x128xbf16> to vector<128x128xbf16>
    %35 = vector.extract_strided_slice %33 {offsets = [128, 0], sizes = [128, 128], strides = [1, 1]} : vector<256x128xbf16> to vector<128x128xbf16>
    %36 = tpu.concatenate %34, %35, %31 in 1 : vector<128x128xbf16>, vector<128x128xbf16>, vector<128x128xbf16> -> vector<128x384xbf16>
    %c2 = arith.constant 2 : index
    %c0_20 = arith.constant 0 : index
    %c0_21 = arith.constant 0 : index
    %37 = vector.load %arg2[%c2, %c0_20, %c0_21] : memref<3x384x128xbf16, #tpu.memory_space<vmem>>, vector<1x384x128xbf16>
    %38 = vector.shape_cast %37 : vector<1x384x128xbf16> to vector<384x128xbf16>
    %cst_22 = arith.constant dense<0.000000e+00> : vector<128x128xf32>
    %39 = tpu.matmul %36, %38, %cst_22 {dimension_numbers = #tpu.dot_dimension_numbers<[1], [0], [0], [1], [0, 0, 1, 1], [], []>} : vector<128x384xbf16>, vector<384x128xbf16>, vector<128x128xf32> -> vector<128x128xf32>
    %c2_23 = arith.constant 2 : index
    %c0_24 = arith.constant 0 : index
    %c0_25 = arith.constant 0 : index
    %40 = vector.load %arg3[%c2_23, %c0_24, %c0_25] : memref<3x1x128xf32, #tpu.memory_space<vmem>>, vector<1x1x128xf32>
    %41 = vector.shape_cast %40 : vector<1x1x128xf32> to vector<1x128xf32>
    %42 = vector.broadcast %41 : vector<1x128xf32> to vector<128x128xf32>
    %43 = arith.addf %39, %42 : vector<128x128xf32>
    %44 = arith.truncf %43 : vector<128x128xf32> to vector<128x128xbf16>
    %c0_26 = arith.constant 0 : index
    %c0_27 = arith.constant 0 : index
    %45 = vector.load %arg4[%c0_26, %c0_27] : memref<128x128xbf16, #tpu.memory_space<vmem>>, vector<128x128xbf16>
    tpu.vector_store %arg4[%c0_26, %c0_27], %44 {strides = array<i32>} : memref<128x128xbf16, #tpu.memory_space<vmem>>, vector<128x128xbf16>,
    return
  }
}

</mosaic_0001>

<llo_original>
// kernel: gnn_embeds_forward.1
$region0: #{gnn_embeds_forward.1}
  #allocation0 [shape = 'u32[]', space=smem, size = 0x4, offset = 0x4, fixed_abs, tag = 'smem constant byte address 0x4 - core index']
  #allocation1 [shape = 'u32[144,128]{1,0:T(1,128)}', space=vmem, size = 0x12000, scoped, tag = 'internal scratch']
  %s0 = inlined_call_operand.vmem [shape: bf16[256,128], index: 0, kind: input, shape index: {}]
  %s1 = inlined_call_operand.vmem [shape: bf16[128,128], index: 1, kind: input, shape index: {}]
  %s2 = inlined_call_operand.vmem [shape: bf16[3,384,128], index: 2, kind: input, shape index: {}]
  %s3 = inlined_call_operand.vmem [shape: f32[3,1,128], index: 3, kind: input, shape index: {}]
  %s4 = inlined_call_operand.vmem [shape: bf16[128,128], index: 4, kind: output, shape index: {}]
  %s5 = sld [smem:[#allocation0]]
  $region26: #{gnn_embeds_forward.1} parent=0
    _
  %s7 = ssub.s32 1, %s5
  %s8 = scalar_select 0, %s7, %s5
  // Predicated region
  $region2: #{gnn_embeds_forward.1} parent=0 // pred_check
    _
  $region3: #{gnn_embeds_forward.1} parent=0 // pred_check_branch
    %10 = sbr.rel (0) target = $region5
  $region4: #{gnn_embeds_forward.1} parent=0 // pred_region
    _
  $region5: #{gnn_embeds_forward.1} parent=0 // pred_fallthru
    _
  // Predicated region
  $region6: #{gnn_embeds_forward.1} parent=0 // pred_check
    _
  $region7: #{gnn_embeds_forward.1} parent=0 // pred_check_branch
    %12 = sbr.rel (0) target = $region9
  $region8: #{gnn_embeds_forward.1} parent=0 // pred_region
    _
  $region9: #{gnn_embeds_forward.1} parent=0 // pred_fallthru
    _
  // Predicated region
  $region10: #{gnn_embeds_forward.1} parent=0 // pred_check
    _
  $region11: #{gnn_embeds_forward.1} parent=0 // pred_check_branch
    %14 = sbr.rel (0) target = $region13
  $region12: #{gnn_embeds_forward.1} parent=0 // pred_region
    _
  $region13: #{gnn_embeds_forward.1} parent=0 // pred_fallthru
    _
  // Predicated region
  $region14: #{gnn_embeds_forward.1} parent=0 // pred_check
    _
  $region15: #{gnn_embeds_forward.1} parent=0 // pred_check_branch
    %16 = sbr.rel (0) target = $region17
  $region16: #{gnn_embeds_forward.1} parent=0 // pred_region
    _
  $region17: #{gnn_embeds_forward.1} parent=0 // pred_fallthru
    _
  %v18 = vld [vmem:[%s0] sm:$0xf]
  %v19 = vld [vmem:[%s0 + $0x4] sm:$0xf]
  %v20 = vld [vmem:[%s0 + $0x8] sm:$0xf]
  %v21 = vld [vmem:[%s0 + $0xc] sm:$0xf]
  %v22 = vld [vmem:[%s0 + $0x10] sm:$0xf]
  %v23 = vld [vmem:[%s0 + $0x14] sm:$0xf]
  %v24 = vld [vmem:[%s0 + $0x18] sm:$0xf]
  %v25 = vld [vmem:[%s0 + $0x1c] sm:$0xf]
  %v26 = vld [vmem:[%s0 + $0x20] sm:$0xf]
  %v27 = vld [vmem:[%s0 + $0x24] sm:$0xf]
  %v28 = vld [vmem:[%s0 + $0x28] sm:$0xf]
  %v29 = vld [vmem:[%s0 + $0x2c] sm:$0xf]
  %v30 = vld [vmem:[%s0 + $0x30] sm:$0xf]
  %v31 = vld [vmem:[%s0 + $0x34] sm:$0xf]
  %v32 = vld [vmem:[%s0 + $0x38] sm:$0xf]
  %v33 = vld [vmem:[%s0 + $0x3c] sm:$0xf]
  %v34 = vld [vmem:[%s0 + $0x40] sm:$0xf]
  %v35 = vld [vmem:[%s0 + $0x44] sm:$0xf]
  %v36 = vld [vmem:[%s0 + $0x48] sm:$0xf]
  %v37 = vld [vmem:[%s0 + $0x4c] sm:$0xf]
  %v38 = vld [vmem:[%s0 + $0x50] sm:$0xf]
  %v39 = vld [vmem:[%s0 + $0x54] sm:$0xf]
  %v40 = vld [vmem:[%s0 + $0x58] sm:$0xf]
  %v41 = vld [vmem:[%s0 + $0x5c] sm:$0xf]
  %v42 = vld [vmem:[%s0 + $0x60] sm:$0xf]
  %v43 = vld [vmem:[%s0 + $0x64] sm:$0xf]
  %v44 = vld [vmem:[%s0 + $0x68] sm:$0xf]
  %v45 = vld [vmem:[%s0 + $0x6c] sm:$0xf]
  %v46 = vld [vmem:[%s0 + $0x70] sm:$0xf]
  %v47 = vld [vmem:[%s0 + $0x74] sm:$0xf]
  %v48 = vld [vmem:[%s0 + $0x78] sm:$0xf]
  %v49 = vld [vmem:[%s0 + $0x7c] sm:$0xf]
  %v50 = vld [vmem:[%s1] sm:$0xf]
  %v51 = vld [vmem:[%s1 + $0x4] sm:$0xf]
  %v52 = vld [vmem:[%s1 + $0x8] sm:$0xf]
  %v53 = vld [vmem:[%s1 + $0xc] sm:$0xf]
  %v54 = vld [vmem:[%s1 + $0x10] sm:$0xf]
  %v55 = vld [vmem:[%s1 + $0x14] sm:$0xf]
  %v56 = vld [vmem:[%s1 + $0x18] sm:$0xf]
  %v57 = vld [vmem:[%s1 + $0x1c] sm:$0xf]
  %v58 = vld [vmem:[%s1 + $0x20] sm:$0xf]
  %v59 = vld [vmem:[%s1 + $0x24] sm:$0xf]
  %v60 = vld [vmem:[%s1 + $0x28] sm:$0xf]
  %v61 = vld [vmem:[%s1 + $0x2c] sm:$0xf]
  %v62 = vld [vmem:[%s1 + $0x30] sm:$0xf]
  %v63 = vld [vmem:[%s1 + $0x34] sm:$0xf]
  %v64 = vld [vmem:[%s1 + $0x38] sm:$0xf]
  %v65 = vld [vmem:[%s1 + $0x3c] sm:$0xf]
  %v98 = vunpack.c.l.b16 %v18
  %v99 = vunpack.c.l.b16 %v19
  %v100 = vunpack.c.l.b16 %v20
  %v101 = vunpack.c.l.b16 %v21
  %v102 = vunpack.c.l.b16 %v22
  %v103 = vunpack.c.l.b16 %v23
  %v104 = vunpack.c.l.b16 %v24
  %v105 = vunpack.c.l.b16 %v25
  %v106 = vunpack.c.l.b16 %v26
  %v107 = vunpack.c.l.b16 %v27
  %v108 = vunpack.c.l.b16 %v28
  %v109 = vunpack.c.l.b16 %v29
  %v110 = vunpack.c.l.b16 %v30
  %v111 = vunpack.c.l.b16 %v31
  %v112 = vunpack.c.l.b16 %v32
  %v113 = vunpack.c.l.b16 %v33
  %v114 = vunpack.c.l.b16 %v34
  %v115 = vunpack.c.l.b16 %v35
  %v116 = vunpack.c.l.b16 %v36
  %v117 = vunpack.c.l.b16 %v37
  %v118 = vunpack.c.l.b16 %v38
  %v119 = vunpack.c.l.b16 %v39
  %v120 = vunpack.c.l.b16 %v40
  %v121 = vunpack.c.l.b16 %v41
  %v122 = vunpack.c.l.b16 %v42
  %v123 = vunpack.c.l.b16 %v43
  %v124 = vunpack.c.l.b16 %v44
  %v125 = vunpack.c.l.b16 %v45
  %v126 = vunpack.c.l.b16 %v46
  %v127 = vunpack.c.l.b16 %v47
  %v128 = vunpack.c.l.b16 %v48
  %v129 = vunpack.c.l.b16 %v49
  %v130 = vpack.c.b16 %v99, %v98
  %v131 = vpack.c.b16 %v101, %v100
  %v132 = vpack.c.b16 %v103, %v102
  %v133 = vpack.c.b16 %v105, %v104
  %v134 = vpack.c.b16 %v107, %v106
  %v135 = vpack.c.b16 %v109, %v108
  %v136 = vpack.c.b16 %v111, %v110
  %v137 = vpack.c.b16 %v113, %v112
  %v138 = vpack.c.b16 %v115, %v114
  %v139 = vpack.c.b16 %v117, %v116
  %v140 = vpack.c.b16 %v119, %v118
  %v141 = vpack.c.b16 %v121, %v120
  %v142 = vpack.c.b16 %v123, %v122
  %v143 = vpack.c.b16 %v125, %v124
  %v144 = vpack.c.b16 %v127, %v126
  %v145 = vpack.c.b16 %v129, %v128
  %v178 = vunpack.c.l.b16 %v50
  %v179 = vunpack.c.l.b16 %v51
  %v180 = vunpack.c.l.b16 %v52
  %v181 = vunpack.c.l.b16 %v53
  %v182 = vunpack.c.l.b16 %v54
  %v183 = vunpack.c.l.b16 %v55
  %v184 = vunpack.c.l.b16 %v56
  %v185 = vunpack.c.l.b16 %v57
  %v186 = vunpack.c.l.b16 %v58
  %v187 = vunpack.c.l.b16 %v59
  %v188 = vunpack.c.l.b16 %v60
  %v189 = vunpack.c.l.b16 %v61
  %v190 = vunpack.c.l.b16 %v62
  %v191 = vunpack.c.l.b16 %v63
  %v192 = vunpack.c.l.b16 %v64
  %v193 = vunpack.c.l.b16 %v65
  %v194 = vpack.c.b16 %v179, %v178
  %v195 = vpack.c.b16 %v181, %v180
  %v196 = vpack.c.b16 %v183, %v182
  %v197 = vpack.c.b16 %v185, %v184
  %v198 = vpack.c.b16 %v187, %v186
  %v199 = vpack.c.b16 %v189, %v188
  %v200 = vpack.c.b16 %v191, %v190
  %v201 = vpack.c.b16 %v193, %v192
  %210 = vmatprep.subr.bf16.mxu0 0
  %211 = vmatpush1.bf16.msra.mxu0 %v194
  %212 = vmatprep.subr.bf16.mxu0 0
  %213 = vmatpush1.bf16.msra.mxu0 %v195
  %214 = vmatprep.subr.bf16.mxu0 0
  %215 = vmatpush1.bf16.msra.mxu0 %v196
  %216 = vmatprep.subr.bf16.mxu0 0
  %217 = vmatpush1.bf16.msra.mxu0 %v197
  %218 = vmatprep.subr.bf16.mxu0 0
  %219 = vmatpush1.bf16.msra.mxu0 %v198
  %220 = vmatprep.subr.bf16.mxu0 0
  %221 = vmatpush1.bf16.msra.mxu0 %v199
  %222 = vmatprep.subr.bf16.mxu0 0
  %223 = vmatpush1.bf16.msra.mxu0 %v200
  %224 = vmatprep.subr.bf16.mxu0 0
  %225 = vmatpush1.bf16.msra.mxu0 %v201
  %226 = vmatprep.subr.bf16.mxu0 0
  %227 = vmatpush1.bf16.msra.mxu0 0
  %228 = vmatprep.subr.bf16.mxu0 0
  %229 = vmatpush1.bf16.msra.mxu0 0
  %230 = vmatprep.subr.bf16.mxu0 0
  %231 = vmatpush1.bf16.msra.mxu0 0
  %232 = vmatprep.subr.bf16.mxu0 0
  %233 = vmatpush1.bf16.msra.mxu0 0
  %234 = vmatprep.subr.bf16.mxu0 0
  %235 = vmatpush1.bf16.msra.mxu0 0
  %236 = vmatprep.subr.bf16.mxu0 0
  %237 = vmatpush1.bf16.msra.mxu0 0
  %238 = vmatprep.subr.bf16.mxu0 0
  %239 = vmatpush1.bf16.msra.mxu0 0
  %240 = vmatprep.subr.bf16.mxu0 0
  %241 = vmatpush1.bf16.msra.mxu0 0
  %242 = vmatprep.mubr.bf16.mxu0 0
  %243 = vmatmul.mubr.bf16.gmra.mrb[0].mxu0 %v130
  %v244 = vpop.f32.mrb[0].mxu0
  %v245 = vadd.f32 0.0, %v244
  %v246 = vpop.f32.mrb[0].mxu0
  %v247 = vpop.f32.mrb[0].mxu0
  %v248 = vadd.f32 0.0, %v247
  %v249 = vpop.f32.mrb[0].mxu0
  %250 = vmatprep.mubr.bf16.mxu0 0
  %251 = vmatmul.mubr.bf16.gmra.mrb[0].mxu0 %v131
  %v252 = vpop.f32.mrb[0].mxu0
  %v253 = vadd.f32 0.0, %v252
  %v254 = vpop.f32.mrb[0].mxu0
  %v255 = vpop.f32.mrb[0].mxu0
  %v256 = vadd.f32 0.0, %v255
  %v257 = vpop.f32.mrb[0].mxu0
  %258 = vmatprep.mubr.bf16.mxu0 0
  %259 = vmatmul.mubr.bf16.gmra.mrb[0].mxu0 %v132
  %v260 = vpop.f32.mrb[0].mxu0
  %v261 = vadd.f32 0.0, %v260
  %v262 = vpop.f32.mrb[0].mxu0
  %v263 = vpop.f32.mrb[0].mxu0
  %v264 = vadd.f32 0.0, %v263
  %v265 = vpop.f32.mrb[0].mxu0
  %266 = vmatprep.mubr.bf16.mxu0 0
  %267 = vmatmul.mubr.bf16.gmra.mrb[0].mxu0 %v133
  %v268 = vpop.f32.mrb[0].mxu0
  %v269 = vadd.f32 0.0, %v268
  %v270 = vpop.f32.mrb[0].mxu0
  %v271 = vpop.f32.mrb[0].mxu0
  %v272 = vadd.f32 0.0, %v271
  %v273 = vpop.f32.mrb[0].mxu0
  %274 = vmatprep.mubr.bf16.mxu0 0
  %275 = vmatmul.mubr.bf16.gmra.mrb[0].mxu0 %v134
  %v276 = vpop.f32.mrb[0].mxu0
  %v277 = vadd.f32 0.0, %v276
  %v278 = vpop.f32.mrb[0].mxu0
  %v279 = vpop.f32.mrb[0].mxu0
  %v280 = vadd.f32 0.0, %v279
  %v281 = vpop.f32.mrb[0].mxu0
  %282 = vmatprep.mubr.bf16.mxu0 0
  %283 = vmatmul.mubr.bf16.gmra.mrb[0].mxu0 %v135
  %v284 = vpop.f32.mrb[0].mxu0
  %v285 = vadd.f32 0.0, %v284
  %v286 = vpop.f32.mrb[0].mxu0
  %v287 = vpop.f32.mrb[0].mxu0
  %v288 = vadd.f32 0.0, %v287
  %v289 = vpop.f32.mrb[0].mxu0
  %290 = vmatprep.mubr.bf16.mxu0 0
  %291 = vmatmul.mubr.bf16.gmra.mrb[0].mxu0 %v136
  %v292 = vpop.f32.mrb[0].mxu0
  %v293 = vadd.f32 0.0, %v292
  %v294 = vpop.f32.mrb[0].mxu0
  %v295 = vpop.f32.mrb[0].mxu0
  %v296 = vadd.f32 0.0, %v295
  %v297 = vpop.f32.mrb[0].mxu0
  %298 = vmatprep.mubr.bf16.mxu0 0
  %299 = vmatmul.mubr.bf16.gmra.mrb[0].mxu0 %v137
  %v300 = vpop.f32.mrb[0].mxu0
  %v301 = vadd.f32 0.0, %v300
  %v302 = vpop.f32.mrb[0].mxu0
  %v303 = vpop.f32.mrb[0].mxu0
  %v304 = vadd.f32 0.0, %v303
  %v305 = vpop.f32.mrb[0].mxu0
  %306 = vmatprep.mubr.bf16.mxu0 0
  %307 = vmatmul.mubr.bf16.gmra.mrb[0].mxu0 %v138
  %v308 = vpop.f32.mrb[0].mxu0
  %v309 = vadd.f32 0.0, %v308
  %v310 = vpop.f32.mrb[0].mxu0
  %v311 = vpop.f32.mrb[0].mxu0
  %v312 = vadd.f32 0.0, %v311
  %v313 = vpop.f32.mrb[0].mxu0
  %314 = vmatprep.mubr.bf16.mxu0 0
  %315 = vmatmul.mubr.bf16.gmra.mrb[0].mxu0 %v139
  %v316 = vpop.f32.mrb[0].mxu0
  %v317 = vadd.f32 0.0, %v316
  %v318 = vpop.f32.mrb[0].mxu0
  %v319 = vpop.f32.mrb[0].mxu0
  %v320 = vadd.f32 0.0, %v319
  %v321 = vpop.f32.mrb[0].mxu0
  %322 = vmatprep.mubr.bf16.mxu0 0
  %323 = vmatmul.mubr.bf16.gmra.mrb[0].mxu0 %v140
  %v324 = vpop.f32.mrb[0].mxu0
  %v325 = vadd.f32 0.0, %v324
  %v326 = vpop.f32.mrb[0].mxu0
  %v327 = vpop.f32.mrb[0].mxu0
  %v328 = vadd.f32 0.0, %v327
  %v329 = vpop.f32.mrb[0].mxu0
  %330 = vmatprep.mubr.bf16.mxu0 0
  %331 = vmatmul.mubr.bf16.gmra.mrb[0].mxu0 %v141
  %v332 = vpop.f32.mrb[0].mxu0
  %v333 = vadd.f32 0.0, %v332
  %v334 = vpop.f32.mrb[0].mxu0
  %v335 = vpop.f32.mrb[0].mxu0
  %v336 = vadd.f32 0.0, %v335
  %v337 = vpop.f32.mrb[0].mxu0
  %338 = vmatprep.mubr.bf16.mxu0 0
  %339 = vmatmul.mubr.bf16.gmra.mrb[0].mxu0 %v142
  %v340 = vpop.f32.mrb[0].mxu0
  %v341 = vadd.f32 0.0, %v340
  %v342 = vpop.f32.mrb[0].mxu0
  %v343 = vpop.f32.mrb[0].mxu0
  %v344 = vadd.f32 0.0, %v343
  %v345 = vpop.f32.mrb[0].mxu0
  %346 = vmatprep.mubr.bf16.mxu0 0
  %347 = vmatmul.mubr.bf16.gmra.mrb[0].mxu0 %v143
  %v348 = vpop.f32.mrb[0].mxu0
  %v349 = vadd.f32 0.0, %v348
  %v350 = vpop.f32.mrb[0].mxu0
  %v351 = vpop.f32.mrb[0].mxu0
  %v352 = vadd.f32 0.0, %v351
  %v353 = vpop.f32.mrb[0].mxu0
  %354 = vmatprep.mubr.bf16.mxu0 0
  %355 = vmatmul.mubr.bf16.gmra.mrb[0].mxu0 %v144
  %v356 = vpop.f32.mrb[0].mxu0
  %v357 = vadd.f32 0.0, %v356
  %v358 = vpop.f32.mrb[0].mxu0
  %v359 = vpop.f32.mrb[0].mxu0
  %v360 = vadd.f32 0.0, %v359
  %v361 = vpop.f32.mrb[0].mxu0
  %362 = vmatprep.mubr.bf16.mxu0 0
  %363 = vmatmul.mubr.bf16.gmra.mrb[0].mxu0 %v145
  %v364 = vpop.f32.mrb[0].mxu0
  %v365 = vadd.f32 0.0, %v364
  %v366 = vpop.f32.mrb[0].mxu0
  %v367 = vpop.f32.mrb[0].mxu0
  %v368 = vadd.f32 0.0, %v367
  %v369 = vpop.f32.mrb[0].mxu0
  %370 = vdwg.mxu0
  %v371 = vpack.c.bf16 %v248, %v245
  %v372 = vpack.c.bf16 %v256, %v253
  %v373 = vpack.c.bf16 %v264, %v261
  %v374 = vpack.c.bf16 %v272, %v269
  %v375 = vpack.c.bf16 %v280, %v277
  %v376 = vpack.c.bf16 %v288, %v285
  %v377 = vpack.c.bf16 %v296, %v293
  %v378 = vpack.c.bf16 %v304, %v301
  %v379 = vpack.c.bf16 %v312, %v309
  %v380 = vpack.c.bf16 %v320, %v317
  %v381 = vpack.c.bf16 %v328, %v325
  %v382 = vpack.c.bf16 %v336, %v333
  %v383 = vpack.c.bf16 %v344, %v341
  %v384 = vpack.c.bf16 %v352, %v349
  %v385 = vpack.c.bf16 %v360, %v357
  %v386 = vpack.c.bf16 %v368, %v365
  %v387 = vld [vmem:[%s2] sm:$0xf]
  %v388 = vld [vmem:[%s2 + $0x4] sm:$0xf]
  %v389 = vld [vmem:[%s2 + $0x8] sm:$0xf]
  %v390 = vld [vmem:[%s2 + $0xc] sm:$0xf]
  %v391 = vld [vmem:[%s2 + $0x10] sm:$0xf]
  %v392 = vld [vmem:[%s2 + $0x14] sm:$0xf]
  %v393 = vld [vmem:[%s2 + $0x18] sm:$0xf]
  %v394 = vld [vmem:[%s2 + $0x1c] sm:$0xf]
  %v395 = vld [vmem:[%s2 + $0x20] sm:$0xf]
  %v396 = vld [vmem:[%s2 + $0x24] sm:$0xf]
  %v397 = vld [vmem:[%s2 + $0x28] sm:$0xf]
  %v398 = vld [vmem:[%s2 + $0x2c] sm:$0xf]
  %v399 = vld [vmem:[%s2 + $0x30] sm:$0xf]
  %v400 = vld [vmem:[%s2 + $0x34] sm:$0xf]
  %v401 = vld [vmem:[%s2 + $0x38] sm:$0xf]
  %v402 = vld [vmem:[%s2 + $0x3c] sm:$0xf]
  %v403 = vld [vmem:[%s2 + $0x40] sm:$0xf]
  %v404 = vld [vmem:[%s2 + $0x44] sm:$0xf]
  %v405 = vld [vmem:[%s2 + $0x48] sm:$0xf]
  %v406 = vld [vmem:[%s2 + $0x4c] sm:$0xf]
  %v407 = vld [vmem:[%s2 + $0x50] sm:$0xf]
  %v408 = vld [vmem:[%s2 + $0x54] sm:$0xf]
  %v409 = vld [vmem:[%s2 + $0x58] sm:$0xf]
  %v410 = vld [vmem:[%s2 + $0x5c] sm:$0xf]
  %v411 = vld [vmem:[%s2 + $0x60] sm:$0xf]
  %v412 = vld [vmem:[%s2 + $0x64] sm:$0xf]
  %v413 = vld [vmem:[%s2 + $0x68] sm:$0xf]
  %v414 = vld [vmem:[%s2 + $0x6c] sm:$0xf]
  %v415 = vld [vmem:[%s2 + $0x70] sm:$0xf]
  %v416 = vld [vmem:[%s2 + $0x74] sm:$0xf]
  %v417 = vld [vmem:[%s2 + $0x78] sm:$0xf]
  %v418 = vld [vmem:[%s2 + $0x7c] sm:$0xf]
  %v419 = vld [vmem:[%s2 + $0x80] sm:$0xf]
  %v420 = vld [vmem:[%s2 + $0x84] sm:$0xf]
  %v421 = vld [vmem:[%s2 + $0x88] sm:$0xf]
  %v422 = vld [vmem:[%s2 + $0x8c] sm:$0xf]
  %v423 = vld [vmem:[%s2 + $0x90] sm:$0xf]
  %v424 = vld [vmem:[%s2 + $0x94] sm:$0xf]
  %v425 = vld [vmem:[%s2 + $0x98] sm:$0xf]
  %v426 = vld [vmem:[%s2 + $0x9c] sm:$0xf]
  %v427 = vld [vmem:[%s2 + $0xa0] sm:$0xf]
  %v428 = vld [vmem:[%s2 + $0xa4] sm:$0xf]
  %v429 = vld [vmem:[%s2 + $0xa8] sm:$0xf]
  %v430 = vld [vmem:[%s2 + $0xac] sm:$0xf]
  %v431 = vld [vmem:[%s2 + $0xb0] sm:$0xf]
  %v432 = vld [vmem:[%s2 + $0xb4] sm:$0xf]
  %v433 = vld [vmem:[%s2 + $0xb8] sm:$0xf]
  %v434 = vld [vmem:[%s2 + $0xbc] sm:$0xf]
  %v435 = vld [vmem:[%s3] sm:$0x1]
  %v437 = vlaneseq
  %v438 = vshrl.u32 %v437, 7
  %v439 = vsub.s32 0, %v438
  %v440 = vrot.slane %v435, %v439
  %v490 = vunpack.c.l.b16 %v387
  %v491 = vunpack.c.l.b16 %v388
  %v492 = vunpack.c.l.b16 %v389
  %v493 = vunpack.c.l.b16 %v390
  %v494 = vunpack.c.l.b16 %v391
  %v495 = vunpack.c.l.b16 %v392
  %v496 = vunpack.c.l.b16 %v393
  %v497 = vunpack.c.l.b16 %v394
  %v498 = vunpack.c.l.b16 %v395
  %v499 = vunpack.c.l.b16 %v396
  %v500 = vunpack.c.l.b16 %v397
  %v501 = vunpack.c.l.b16 %v398
  %v502 = vunpack.c.l.b16 %v399
  %v503 = vunpack.c.l.b16 %v400
  %v504 = vunpack.c.l.b16 %v401
  %v505 = vunpack.c.l.b16 %v402
  %v506 = vunpack.c.l.b16 %v403
  %v507 = vunpack.c.l.b16 %v404
  %v508 = vunpack.c.l.b16 %v405
  %v509 = vunpack.c.l.b16 %v406
  %v510 = vunpack.c.l.b16 %v407
  %v511 = vunpack.c.l.b16 %v408
  %v512 = vunpack.c.l.b16 %v409
  %v513 = vunpack.c.l.b16 %v410
  %v514 = vunpack.c.l.b16 %v411
  %v515 = vunpack.c.l.b16 %v412
  %v516 = vunpack.c.l.b16 %v413
  %v517 = vunpack.c.l.b16 %v414
  %v518 = vunpack.c.l.b16 %v415
  %v519 = vunpack.c.l.b16 %v416
  %v520 = vunpack.c.l.b16 %v417
  %v521 = vunpack.c.l.b16 %v418
  %v522 = vunpack.c.l.b16 %v419
  %v523 = vunpack.c.l.b16 %v420
  %v524 = vunpack.c.l.b16 %v421
  %v525 = vunpack.c.l.b16 %v422
  %v526 = vunpack.c.l.b16 %v423
  %v527 = vunpack.c.l.b16 %v424
  %v528 = vunpack.c.l.b16 %v425
  %v529 = vunpack.c.l.b16 %v426
  %v530 = vunpack.c.l.b16 %v427
  %v531 = vunpack.c.l.b16 %v428
  %v532 = vunpack.c.l.b16 %v429
  %v533 = vunpack.c.l.b16 %v430
  %v534 = vunpack.c.l.b16 %v431
  %v535 = vunpack.c.l.b16 %v432
  %v536 = vunpack.c.l.b16 %v433
  %v537 = vunpack.c.l.b16 %v434
  %v538 = vpack.c.b16 %v491, %v490
  %v539 = vpack.c.b16 %v493, %v492
  %v540 = vpack.c.b16 %v495, %v494
  %v541 = vpack.c.b16 %v497, %v496
  %v542 = vpack.c.b16 %v499, %v498
  %v543 = vpack.c.b16 %v501, %v500
  %v544 = vpack.c.b16 %v503, %v502
  %v545 = vpack.c.b16 %v505, %v504
  %v546 = vpack.c.b16 %v507, %v506
  %v547 = vpack.c.b16 %v509, %v508
  %v548 = vpack.c.b16 %v511, %v510
  %v549 = vpack.c.b16 %v513, %v512
  %v550 = vpack.c.b16 %v515, %v514
  %v551 = vpack.c.b16 %v517, %v516
  %v552 = vpack.c.b16 %v519, %v518
  %v553 = vpack.c.b16 %v521, %v520
  %v554 = vpack.c.b16 %v523, %v522
  %v555 = vpack.c.b16 %v525, %v524
  %v556 = vpack.c.b16 %v527, %v526
  %v557 = vpack.c.b16 %v529, %v528
  %v558 = vpack.c.b16 %v531, %v530
  %v559 = vpack.c.b16 %v533, %v532
  %v560 = vpack.c.b16 %v535, %v534
  %v561 = vpack.c.b16 %v537, %v536
  %586 = vmatprep.subr.bf16.mxu0 0
  %587 = vmatpush1.bf16.msra.mxu0 %v538
  %588 = vmatprep.subr.bf16.mxu0 0
  %589 = vmatpush1.bf16.msra.mxu0 %v539
  %590 = vmatprep.subr.bf16.mxu0 0
  %591 = vmatpush1.bf16.msra.mxu0 %v540
  %592 = vmatprep.subr.bf16.mxu0 0
  %593 = vmatpush1.bf16.msra.mxu0 %v541
  %594 = vmatprep.subr.bf16.mxu0 0
  %595 = vmatpush1.bf16.msra.mxu0 %v542
  %596 = vmatprep.subr.bf16.mxu0 0
  %597 = vmatpush1.bf16.msra.mxu0 %v543
  %598 = vmatprep.subr.bf16.mxu0 0
  %599 = vmatpush1.bf16.msra.mxu0 %v544
  %600 = vmatprep.subr.bf16.mxu0 0
  %601 = vmatpush1.bf16.msra.mxu0 %v545
  %602 = vmatprep.subr.bf16.mxu0 0
  %603 = vmatpush1.bf16.msra.mxu0 %v546
  %604 = vmatprep.subr.bf16.mxu0 0
  %605 = vmatpush1.bf16.msra.mxu0 %v547
  %606 = vmatprep.subr.bf16.mxu0 0
  %607 = vmatpush1.bf16.msra.mxu0 %v548
  %608 = vmatprep.subr.bf16.mxu0 0
  %609 = vmatpush1.bf16.msra.mxu0 %v549
  %610 = vmatprep.subr.bf16.mxu0 0
  %611 = vmatpush1.bf16.msra.mxu0 %v550
  %612 = vmatprep.subr.bf16.mxu0 0
  %613 = vmatpush1.bf16.msra.mxu0 %v551
  %614 = vmatprep.subr.bf16.mxu0 0
  %615 = vmatpush1.bf16.msra.mxu0 %v552
  %616 = vmatprep.subr.bf16.mxu0 0
  %617 = vmatpush1.bf16.msra.mxu0 %v553
  %618 = vmatprep.mubr.bf16.mxu0 %v379
  %619 = vmatmul.mubr.bf16.gmra.mrb[0].mxu0 %v371
  %v620 = vpop.f32.mrb[0].mxu0
  %v621 = vadd.f32 %v440, %v620
  %v622 = vpop.f32.mrb[0].mxu0
  %v623 = vpop.f32.mrb[0].mxu0
  %v624 = vadd.f32 %v440, %v623
  %v625 = vpop.f32.mrb[0].mxu0
  %626 = vmatprep.mubr.bf16.mxu0 %v380
  %627 = vmatmul.mubr.bf16.gmra.mrb[0].mxu0 %v372
  %v628 = vpop.f32.mrb[0].mxu0
  %v629 = vadd.f32 %v440, %v628
  %v630 = vpop.f32.mrb[0].mxu0
  %v631 = vpop.f32.mrb[0].mxu0
  %v632 = vadd.f32 %v440, %v631
  %v633 = vpop.f32.mrb[0].mxu0
  %634 = vmatprep.mubr.bf16.mxu0 %v381
  %635 = vmatmul.mubr.bf16.gmra.mrb[0].mxu0 %v373
  %v636 = vpop.f32.mrb[0].mxu0
  %v637 = vadd.f32 %v440, %v636
  %v638 = vpop.f32.mrb[0].mxu0
  %v639 = vpop.f32.mrb[0].mxu0
  %v640 = vadd.f32 %v440, %v639
  %v641 = vpop.f32.mrb[0].mxu0
  %642 = vmatprep.mubr.bf16.mxu0 %v382
  %643 = vmatmul.mubr.bf16.gmra.mrb[0].mxu0 %v374
  %v644 = vpop.f32.mrb[0].mxu0
  %v645 = vadd.f32 %v440, %v644
  %v646 = vpop.f32.mrb[0].mxu0
  %v647 = vpop.f32.mrb[0].mxu0
  %v648 = vadd.f32 %v440, %v647
  %v649 = vpop.f32.mrb[0].mxu0
  %650 = vmatprep.mubr.bf16.mxu0 %v383
  %651 = vmatmul.mubr.bf16.gmra.mrb[0].mxu0 %v375
  %v652 = vpop.f32.mrb[0].mxu0
  %v653 = vadd.f32 %v440, %v652
  %v654 = vpop.f32.mrb[0].mxu0
  %v655 = vpop.f32.mrb[0].mxu0
  %v656 = vadd.f32 %v440, %v655
  %v657 = vpop.f32.mrb[0].mxu0
  %658 = vmatprep.mubr.bf16.mxu0 %v384
  %659 = vmatmul.mubr.bf16.gmra.mrb[0].mxu0 %v376
  %v660 = vpop.f32.mrb[0].mxu0
  %v661 = vadd.f32 %v440, %v660
  %v662 = vpop.f32.mrb[0].mxu0
  %v663 = vpop.f32.mrb[0].mxu0
  %v664 = vadd.f32 %v440, %v663
  %v665 = vpop.f32.mrb[0].mxu0
  %666 = vmatprep.mubr.bf16.mxu0 %v385
  %667 = vmatmul.mubr.bf16.gmra.mrb[0].mxu0 %v377
  %v668 = vpop.f32.mrb[0].mxu0
  %v669 = vadd.f32 %v440, %v668
  %v670 = vpop.f32.mrb[0].mxu0
  %v671 = vpop.f32.mrb[0].mxu0
  %v672 = vadd.f32 %v440, %v671
  %v673 = vpop.f32.mrb[0].mxu0
  %674 = vmatprep.mubr.bf16.mxu0 %v386
  %675 = vmatmul.mubr.bf16.gmra.mrb[0].mxu0 %v378
  %v676 = vpop.f32.mrb[0].mxu0
  %v677 = vadd.f32 %v440, %v676
  %v678 = vpop.f32.mrb[0].mxu0
  %v679 = vpop.f32.mrb[0].mxu0
  %v680 = vadd.f32 %v440, %v679
  %v681 = vpop.f32.mrb[0].mxu0
  %682 = vdwg.mxu0
  %683 = vmatprep.subr.bf16.mxu0 0
  %684 = vmatpush1.bf16.msra.mxu0 %v554
  %685 = vmatprep.subr.bf16.mxu0 0
  %686 = vmatpush1.bf16.msra.mxu0 %v555
  %687 = vmatprep.subr.bf16.mxu0 0
  %688 = vmatpush1.bf16.msra.mxu0 %v556
  %689 = vmatprep.subr.bf16.mxu0 0
  %690 = vmatpush1.bf16.msra.mxu0 %v557
  %691 = vmatprep.subr.bf16.mxu0 0
  %692 = vmatpush1.bf16.msra.mxu0 %v558
  %693 = vmatprep.subr.bf16.mxu0 0
  %694 = vmatpush1.bf16.msra.mxu0 %v559
  %695 = vmatprep.subr.bf16.mxu0 0
  %696 = vmatpush1.bf16.msra.mxu0 %v560
  %697 = vmatprep.subr.bf16.mxu0 0
  %698 = vmatpush1.bf16.msra.mxu0 %v561
  %699 = vmatprep.subr.bf16.mxu0 0
  %700 = vmatpush1.bf16.msra.mxu0 0
  %701 = vmatprep.subr.bf16.mxu0 0
  %702 = vmatpush1.bf16.msra.mxu0 0
  %703 = vmatprep.subr.bf16.mxu0 0
  %704 = vmatpush1.bf16.msra.mxu0 0
  %705 = vmatprep.subr.bf16.mxu0 0
  %706 = vmatpush1.bf16.msra.mxu0 0
  %707 = vmatprep.subr.bf16.mxu0 0
  %708 = vmatpush1.bf16.msra.mxu0 0
  %709 = vmatprep.subr.bf16.mxu0 0
  %710 = vmatpush1.bf16.msra.mxu0 0
  %711 = vmatprep.subr.bf16.mxu0 0
  %712 = vmatpush1.bf16.msra.mxu0 0
  %713 = vmatprep.subr.bf16.mxu0 0
  %714 = vmatpush1.bf16.msra.mxu0 0
  %715 = vmatprep.mubr.bf16.mxu0 0
  %716 = vmatmul.mubr.bf16.gmra.mrb[0].mxu0 %v194
  %v717 = vpop.f32.mrb[0].mxu0
  %v718 = vadd.f32 %v621, %v717
  %v719 = vpop.f32.mrb[0].mxu0
  %v720 = vpop.f32.mrb[0].mxu0
  %v721 = vadd.f32 %v624, %v720
  %v722 = vpop.f32.mrb[0].mxu0
  %723 = vmatprep.mubr.bf16.mxu0 0
  %724 = vmatmul.mubr.bf16.gmra.mrb[0].mxu0 %v195
  %v725 = vpop.f32.mrb[0].mxu0
  %v726 = vadd.f32 %v629, %v725
  %v727 = vpop.f32.mrb[0].mxu0
  %v728 = vpop.f32.mrb[0].mxu0
  %v729 = vadd.f32 %v632, %v728
  %v730 = vpop.f32.mrb[0].mxu0
  %731 = vmatprep.mubr.bf16.mxu0 0
  %732 = vmatmul.mubr.bf16.gmra.mrb[0].mxu0 %v196
  %v733 = vpop.f32.mrb[0].mxu0
  %v734 = vadd.f32 %v637, %v733
  %v735 = vpop.f32.mrb[0].mxu0
  %v736 = vpop.f32.mrb[0].mxu0
  %v737 = vadd.f32 %v640, %v736
  %v738 = vpop.f32.mrb[0].mxu0
  %739 = vmatprep.mubr.bf16.mxu0 0
  %740 = vmatmul.mubr.bf16.gmra.mrb[0].mxu0 %v197
  %v741 = vpop.f32.mrb[0].mxu0
  %v742 = vadd.f32 %v645, %v741
  %v743 = vpop.f32.mrb[0].mxu0
  %v744 = vpop.f32.mrb[0].mxu0
  %v745 = vadd.f32 %v648, %v744
  %v746 = vpop.f32.mrb[0].mxu0
  %747 = vmatprep.mubr.bf16.mxu0 0
  %748 = vmatmul.mubr.bf16.gmra.mrb[0].mxu0 %v198
  %v749 = vpop.f32.mrb[0].mxu0
  %v750 = vadd.f32 %v653, %v749
  %v751 = vpop.f32.mrb[0].mxu0
  %v752 = vpop.f32.mrb[0].mxu0
  %v753 = vadd.f32 %v656, %v752
  %v754 = vpop.f32.mrb[0].mxu0
  %755 = vmatprep.mubr.bf16.mxu0 0
  %756 = vmatmul.mubr.bf16.gmra.mrb[0].mxu0 %v199
  %v757 = vpop.f32.mrb[0].mxu0
  %v758 = vadd.f32 %v661, %v757
  %v759 = vpop.f32.mrb[0].mxu0
  %v760 = vpop.f32.mrb[0].mxu0
  %v761 = vadd.f32 %v664, %v760
  %v762 = vpop.f32.mrb[0].mxu0
  %763 = vmatprep.mubr.bf16.mxu0 0
  %764 = vmatmul.mubr.bf16.gmra.mrb[0].mxu0 %v200
  %v765 = vpop.f32.mrb[0].mxu0
  %v766 = vadd.f32 %v669, %v765
  %v767 = vpop.f32.mrb[0].mxu0
  %v768 = vpop.f32.mrb[0].mxu0
  %v769 = vadd.f32 %v672, %v768
  %v770 = vpop.f32.mrb[0].mxu0
  %771 = vmatprep.mubr.bf16.mxu0 0
  %772 = vmatmul.mubr.bf16.gmra.mrb[0].mxu0 %v201
  %v773 = vpop.f32.mrb[0].mxu0
  %v774 = vadd.f32 %v677, %v773
  %v775 = vpop.f32.mrb[0].mxu0
  %v776 = vpop.f32.mrb[0].mxu0
  %v777 = vadd.f32 %v680, %v776
  %v778 = vpop.f32.mrb[0].mxu0
  %779 = vdwg.mxu0
  %v780 = vmax.f32 %v718, 0.0
  %v781 = vmax.f32 %v721, 0.0
  %v782 = vmax.f32 %v726, 0.0
  %v783 = vmax.f32 %v729, 0.0
  %v784 = vmax.f32 %v734, 0.0
  %v785 = vmax.f32 %v737, 0.0
  %v786 = vmax.f32 %v742, 0.0
  %v787 = vmax.f32 %v745, 0.0
  %v788 = vmax.f32 %v750, 0.0
  %v789 = vmax.f32 %v753, 0.0
  %v790 = vmax.f32 %v758, 0.0
  %v791 = vmax.f32 %v761, 0.0
  %v792 = vmax.f32 %v766, 0.0
  %v793 = vmax.f32 %v769, 0.0
  %v794 = vmax.f32 %v774, 0.0
  %v795 = vmax.f32 %v777, 0.0
  %v796 = vpack.c.bf16 %v781, %v780
  %v797 = vpack.c.bf16 %v783, %v782
  %v798 = vpack.c.bf16 %v785, %v784
  %v799 = vpack.c.bf16 %v787, %v786
  %v800 = vpack.c.bf16 %v789, %v788
  %v801 = vpack.c.bf16 %v791, %v790
  %v802 = vpack.c.bf16 %v793, %v792
  %v803 = vpack.c.bf16 %v795, %v794
  %804 = vmatprep.subr.bf16.mxu0 0
  %805 = vmatpush1.bf16.msra.mxu0 %v796
  %806 = vmatprep.subr.bf16.mxu0 0
  %807 = vmatpush1.bf16.msra.mxu0 %v797
  %808 = vmatprep.subr.bf16.mxu0 0
  %809 = vmatpush1.bf16.msra.mxu0 %v798
  %810 = vmatprep.subr.bf16.mxu0 0
  %811 = vmatpush1.bf16.msra.mxu0 %v799
  %812 = vmatprep.subr.bf16.mxu0 0
  %813 = vmatpush1.bf16.msra.mxu0 %v800
  %814 = vmatprep.subr.bf16.mxu0 0
  %815 = vmatpush1.bf16.msra.mxu0 %v801
  %816 = vmatprep.subr.bf16.mxu0 0
  %817 = vmatpush1.bf16.msra.mxu0 %v802
  %818 = vmatprep.subr.bf16.mxu0 0
  %819 = vmatpush1.bf16.msra.mxu0 %v803
  %820 = vmatprep.subr.bf16.mxu0 0
  %821 = vmatpush1.bf16.msra.mxu0 0
  %822 = vmatprep.subr.bf16.mxu0 0
  %823 = vmatpush1.bf16.msra.mxu0 0
  %824 = vmatprep.subr.bf16.mxu0 0
  %825 = vmatpush1.bf16.msra.mxu0 0
  %826 = vmatprep.subr.bf16.mxu0 0
  %827 = vmatpush1.bf16.msra.mxu0 0
  %828 = vmatprep.subr.bf16.mxu0 0
  %829 = vmatpush1.bf16.msra.mxu0 0
  %830 = vmatprep.subr.bf16.mxu0 0
  %831 = vmatpush1.bf16.msra.mxu0 0
  %832 = vmatprep.subr.bf16.mxu0 0
  %833 = vmatpush1.bf16.msra.mxu0 0
  %834 = vmatprep.subr.bf16.mxu0 0
  %835 = vmatpush1.bf16.msra.mxu0 0
  %836 = vmatprep.mubr.bf16.mxu0 0
  %837 = vmatmul.mubr.bf16.gmra.mrb[0].mxu0 %v130
  %v838 = vpop.f32.mrb[0].mxu0
  %v839 = vadd.f32 0.0, %v838
  %v840 = vpop.f32.mrb[0].mxu0
  %v841 = vpop.f32.mrb[0].mxu0
  %v842 = vadd.f32 0.0, %v841
  %v843 = vpop.f32.mrb[0].mxu0
  %844 = vmatprep.mubr.bf16.mxu0 0
  %845 = vmatmul.mubr.bf16.gmra.mrb[0].mxu0 %v131
  %v846 = vpop.f32.mrb[0].mxu0
  %v847 = vadd.f32 0.0, %v846
  %v848 = vpop.f32.mrb[0].mxu0
  %v849 = vpop.f32.mrb[0].mxu0
  %v850 = vadd.f32 0.0, %v849
  %v851 = vpop.f32.mrb[0].mxu0
  %852 = vmatprep.mubr.bf16.mxu0 0
  %853 = vmatmul.mubr.bf16.gmra.mrb[0].mxu0 %v132
  %v854 = vpop.f32.mrb[0].mxu0
  %v855 = vadd.f32 0.0, %v854
  %v856 = vpop.f32.mrb[0].mxu0
  %v857 = vpop.f32.mrb[0].mxu0
  %v858 = vadd.f32 0.0, %v857
  %v859 = vpop.f32.mrb[0].mxu0
  %860 = vmatprep.mubr.bf16.mxu0 0
  %861 = vmatmul.mubr.bf16.gmra.mrb[0].mxu0 %v133
  %v862 = vpop.f32.mrb[0].mxu0
  %v863 = vadd.f32 0.0, %v862
  %v864 = vpop.f32.mrb[0].mxu0
  %v865 = vpop.f32.mrb[0].mxu0
  %v866 = vadd.f32 0.0, %v865
  %v867 = vpop.f32.mrb[0].mxu0
  %868 = vmatprep.mubr.bf16.mxu0 0
  %869 = vmatmul.mubr.bf16.gmra.mrb[0].mxu0 %v134
  %v870 = vpop.f32.mrb[0].mxu0
  %v871 = vadd.f32 0.0, %v870
  %v872 = vpop.f32.mrb[0].mxu0
  %v873 = vpop.f32.mrb[0].mxu0
  %v874 = vadd.f32 0.0, %v873
  %v875 = vpop.f32.mrb[0].mxu0
  %876 = vmatprep.mubr.bf16.mxu0 0
  %877 = vmatmul.mubr.bf16.gmra.mrb[0].mxu0 %v135
  %v878 = vpop.f32.mrb[0].mxu0
  %v879 = vadd.f32 0.0, %v878
  %v880 = vpop.f32.mrb[0].mxu0
  %v881 = vpop.f32.mrb[0].mxu0
  %v882 = vadd.f32 0.0, %v881
  %v883 = vpop.f32.mrb[0].mxu0
  %884 = vmatprep.mubr.bf16.mxu0 0
  %885 = vmatmul.mubr.bf16.gmra.mrb[0].mxu0 %v136
  %v886 = vpop.f32.mrb[0].mxu0
  %v887 = vadd.f32 0.0, %v886
  %v888 = vpop.f32.mrb[0].mxu0
  %v889 = vpop.f32.mrb[0].mxu0
  %v890 = vadd.f32 0.0, %v889
  %v891 = vpop.f32.mrb[0].mxu0
  %892 = vmatprep.mubr.bf16.mxu0 0
  %893 = vmatmul.mubr.bf16.gmra.mrb[0].mxu0 %v137
  %v894 = vpop.f32.mrb[0].mxu0
  %v895 = vadd.f32 0.0, %v894
  %v896 = vpop.f32.mrb[0].mxu0
  %v897 = vpop.f32.mrb[0].mxu0
  %v898 = vadd.f32 0.0, %v897
  %v899 = vpop.f32.mrb[0].mxu0
  %900 = vmatprep.mubr.bf16.mxu0 0
  %901 = vmatmul.mubr.bf16.gmra.mrb[0].mxu0 %v138
  %v902 = vpop.f32.mrb[0].mxu0
  %v903 = vadd.f32 0.0, %v902
  %v904 = vpop.f32.mrb[0].mxu0
  %v905 = vpop.f32.mrb[0].mxu0
  %v906 = vadd.f32 0.0, %v905
  %v907 = vpop.f32.mrb[0].mxu0
  %908 = vmatprep.mubr.bf16.mxu0 0
  %909 = vmatmul.mubr.bf16.gmra.mrb[0].mxu0 %v139
  %v910 = vpop.f32.mrb[0].mxu0
  %v911 = vadd.f32 0.0, %v910
  %v912 = vpop.f32.mrb[0].mxu0
  %v913 = vpop.f32.mrb[0].mxu0
  %v914 = vadd.f32 0.0, %v913
  %v915 = vpop.f32.mrb[0].mxu0
  %916 = vmatprep.mubr.bf16.mxu0 0
  %917 = vmatmul.mubr.bf16.gmra.mrb[0].mxu0 %v140
  %v918 = vpop.f32.mrb[0].mxu0
  %v919 = vadd.f32 0.0, %v918
  %v920 = vpop.f32.mrb[0].mxu0
  %v921 = vpop.f32.mrb[0].mxu0
  %v922 = vadd.f32 0.0, %v921
  %v923 = vpop.f32.mrb[0].mxu0
  %924 = vmatprep.mubr.bf16.mxu0 0
  %925 = vmatmul.mubr.bf16.gmra.mrb[0].mxu0 %v141
  %v926 = vpop.f32.mrb[0].mxu0
  %v927 = vadd.f32 0.0, %v926
  %v928 = vpop.f32.mrb[0].mxu0
  %v929 = vpop.f32.mrb[0].mxu0
  %v930 = vadd.f32 0.0, %v929
  %v931 = vpop.f32.mrb[0].mxu0
  %932 = vmatprep.mubr.bf16.mxu0 0
  %933 = vmatmul.mubr.bf16.gmra.mrb[0].mxu0 %v142
  %v934 = vpop.f32.mrb[0].mxu0
  %v935 = vadd.f32 0.0, %v934
  %v936 = vpop.f32.mrb[0].mxu0
  %v937 = vpop.f32.mrb[0].mxu0
  %v938 = vadd.f32 0.0, %v937
  %v939 = vpop.f32.mrb[0].mxu0
  %940 = vmatprep.mubr.bf16.mxu0 0
  %941 = vmatmul.mubr.bf16.gmra.mrb[0].mxu0 %v143
  %v942 = vpop.f32.mrb[0].mxu0
  %v943 = vadd.f32 0.0, %v942
  %v944 = vpop.f32.mrb[0].mxu0
  %v945 = vpop.f32.mrb[0].mxu0
  %v946 = vadd.f32 0.0, %v945
  %v947 = vpop.f32.mrb[0].mxu0
  %948 = vmatprep.mubr.bf16.mxu0 0
  %949 = vmatmul.mubr.bf16.gmra.mrb[0].mxu0 %v144
  %v950 = vpop.f32.mrb[0].mxu0
  %v951 = vadd.f32 0.0, %v950
  %v952 = vpop.f32.mrb[0].mxu0
  %v953 = vpop.f32.mrb[0].mxu0
  %v954 = vadd.f32 0.0, %v953
  %v955 = vpop.f32.mrb[0].mxu0
  %956 = vmatprep.mubr.bf16.mxu0 0
  %957 = vmatmul.mubr.bf16.gmra.mrb[0].mxu0 %v145
  %v958 = vpop.f32.mrb[0].mxu0
  %v959 = vadd.f32 0.0, %v958
  %v960 = vpop.f32.mrb[0].mxu0
  %v961 = vpop.f32.mrb[0].mxu0
  %v962 = vadd.f32 0.0, %v961
  %v963 = vpop.f32.mrb[0].mxu0
  %964 = vdwg.mxu0
  %v965 = vpack.c.bf16 %v842, %v839
  %v966 = vpack.c.bf16 %v850, %v847
  %v967 = vpack.c.bf16 %v858, %v855
  %v968 = vpack.c.bf16 %v866, %v863
  %v969 = vpack.c.bf16 %v874, %v871
  %v970 = vpack.c.bf16 %v882, %v879
  %v971 = vpack.c.bf16 %v890, %v887
  %v972 = vpack.c.bf16 %v898, %v895
  %v973 = vpack.c.bf16 %v906, %v903
  %v974 = vpack.c.bf16 %v914, %v911
  %v975 = vpack.c.bf16 %v922, %v919
  %v976 = vpack.c.bf16 %v930, %v927
  %v977 = vpack.c.bf16 %v938, %v935
  %v978 = vpack.c.bf16 %v946, %v943
  %v979 = vpack.c.bf16 %v954, %v951
  %v980 = vpack.c.bf16 %v962, %v959
  %s981 = scalar_lea.vmem %s2, 192
  %v982 = vld [vmem:[%s981] sm:$0xf]
  %v983 = vld [vmem:[%s981 + $0x4] sm:$0xf]
  %v984 = vld [vmem:[%s981 + $0x8] sm:$0xf]
  %v985 = vld [vmem:[%s981 + $0xc] sm:$0xf]
  %v986 = vld [vmem:[%s981 + $0x10] sm:$0xf]
  %v987 = vld [vmem:[%s981 + $0x14] sm:$0xf]
  %v988 = vld [vmem:[%s981 + $0x18] sm:$0xf]
  %v989 = vld [vmem:[%s981 + $0x1c] sm:$0xf]
  %v990 = vld [vmem:[%s981 + $0x20] sm:$0xf]
  %v991 = vld [vmem:[%s981 + $0x24] sm:$0xf]
  %v992 = vld [vmem:[%s981 + $0x28] sm:$0xf]
  %v993 = vld [vmem:[%s981 + $0x2c] sm:$0xf]
  %v994 = vld [vmem:[%s981 + $0x30] sm:$0xf]
  %v995 = vld [vmem:[%s981 + $0x34] sm:$0xf]
  %v996 = vld [vmem:[%s981 + $0x38] sm:$0xf]
  %v997 = vld [vmem:[%s981 + $0x3c] sm:$0xf]
  %v998 = vld [vmem:[%s981 + $0x40] sm:$0xf]
  %v999 = vld [vmem:[%s981 + $0x44] sm:$0xf]
  %v1000 = vld [vmem:[%s981 + $0x48] sm:$0xf]
  %v1001 = vld [vmem:[%s981 + $0x4c] sm:$0xf]
  %v1002 = vld [vmem:[%s981 + $0x50] sm:$0xf]
  %v1003 = vld [vmem:[%s981 + $0x54] sm:$0xf]
  %v1004 = vld [vmem:[%s981 + $0x58] sm:$0xf]
  %v1005 = vld [vmem:[%s981 + $0x5c] sm:$0xf]
  %v1006 = vld [vmem:[%s981 + $0x60] sm:$0xf]
  %v1007 = vld [vmem:[%s981 + $0x64] sm:$0xf]
  %v1008 = vld [vmem:[%s981 + $0x68] sm:$0xf]
  %v1009 = vld [vmem:[%s981 + $0x6c] sm:$0xf]
  %v1010 = vld [vmem:[%s981 + $0x70] sm:$0xf]
  %v1011 = vld [vmem:[%s981 + $0x74] sm:$0xf]
  %v1012 = vld [vmem:[%s981 + $0x78] sm:$0xf]
  %v1013 = vld [vmem:[%s981 + $0x7c] sm:$0xf]
  %v1014 = vld [vmem:[%s981 + $0x80] sm:$0xf]
  %v1015 = vld [vmem:[%s981 + $0x84] sm:$0xf]
  %v1016 = vld [vmem:[%s981 + $0x88] sm:$0xf]
  %v1017 = vld [vmem:[%s981 + $0x8c] sm:$0xf]
  %v1018 = vld [vmem:[%s981 + $0x90] sm:$0xf]
  %v1019 = vld [vmem:[%s981 + $0x94] sm:$0xf]
  %v1020 = vld [vmem:[%s981 + $0x98] sm:$0xf]
  %v1021 = vld [vmem:[%s981 + $0x9c] sm:$0xf]
  %v1022 = vld [vmem:[%s981 + $0xa0] sm:$0xf]
  %v1023 = vld [vmem:[%s981 + $0xa4] sm:$0xf]
  %v1024 = vld [vmem:[%s981 + $0xa8] sm:$0xf]
  %v1025 = vld [vmem:[%s981 + $0xac] sm:$0xf]
  %v1026 = vld [vmem:[%s981 + $0xb0] sm:$0xf]
  %v1027 = vld [vmem:[%s981 + $0xb4] sm:$0xf]
  %v1028 = vld [vmem:[%s981 + $0xb8] sm:$0xf]
  %v1029 = vld [vmem:[%s981 + $0xbc] sm:$0xf]
  %s1030 = scalar_lea.vmem %s3, 1
  %v1031 = vld [vmem:[%s1030] sm:$0x1]
  %v1033 = vlaneseq
  %v1034 = vshrl.u32 %v1033, 7
  %v1035 = vsub.s32 0, %v1034
  %v1036 = vrot.slane %v1031, %v1035
  %v1086 = vunpack.c.l.b16 %v982
  %v1087 = vunpack.c.l.b16 %v983
  %v1088 = vunpack.c.l.b16 %v984
  %v1089 = vunpack.c.l.b16 %v985
  %v1090 = vunpack.c.l.b16 %v986
  %v1091 = vunpack.c.l.b16 %v987
  %v1092 = vunpack.c.l.b16 %v988
  %v1093 = vunpack.c.l.b16 %v989
  %v1094 = vunpack.c.l.b16 %v990
  %v1095 = vunpack.c.l.b16 %v991
  %v1096 = vunpack.c.l.b16 %v992
  %v1097 = vunpack.c.l.b16 %v993
  %v1098 = vunpack.c.l.b16 %v994
  %v1099 = vunpack.c.l.b16 %v995
  %v1100 = vunpack.c.l.b16 %v996
  %v1101 = vunpack.c.l.b16 %v997
  %v1102 = vunpack.c.l.b16 %v998
  %v1103 = vunpack.c.l.b16 %v999
  %v1104 = vunpack.c.l.b16 %v1000
  %v1105 = vunpack.c.l.b16 %v1001
  %v1106 = vunpack.c.l.b16 %v1002
  %v1107 = vunpack.c.l.b16 %v1003
  %v1108 = vunpack.c.l.b16 %v1004
  %v1109 = vunpack.c.l.b16 %v1005
  %v1110 = vunpack.c.l.b16 %v1006
  %v1111 = vunpack.c.l.b16 %v1007
  %v1112 = vunpack.c.l.b16 %v1008
  %v1113 = vunpack.c.l.b16 %v1009
  %v1114 = vunpack.c.l.b16 %v1010
  %v1115 = vunpack.c.l.b16 %v1011
  %v1116 = vunpack.c.l.b16 %v1012
  %v1117 = vunpack.c.l.b16 %v1013
  %v1118 = vunpack.c.l.b16 %v1014
  %v1119 = vunpack.c.l.b16 %v1015
  %v1120 = vunpack.c.l.b16 %v1016
  %v1121 = vunpack.c.l.b16 %v1017
  %v1122 = vunpack.c.l.b16 %v1018
  %v1123 = vunpack.c.l.b16 %v1019
  %v1124 = vunpack.c.l.b16 %v1020
  %v1125 = vunpack.c.l.b16 %v1021
  %v1126 = vunpack.c.l.b16 %v1022
  %v1127 = vunpack.c.l.b16 %v1023
  %v1128 = vunpack.c.l.b16 %v1024
  %v1129 = vunpack.c.l.b16 %v1025
  %v1130 = vunpack.c.l.b16 %v1026
  %v1131 = vunpack.c.l.b16 %v1027
  %v1132 = vunpack.c.l.b16 %v1028
  %v1133 = vunpack.c.l.b16 %v1029
  %v1134 = vpack.c.b16 %v1087, %v1086
  %v1135 = vpack.c.b16 %v1089, %v1088
  %v1136 = vpack.c.b16 %v1091, %v1090
  %v1137 = vpack.c.b16 %v1093, %v1092
  %v1138 = vpack.c.b16 %v1095, %v1094
  %v1139 = vpack.c.b16 %v1097, %v1096
  %v1140 = vpack.c.b16 %v1099, %v1098
  %v1141 = vpack.c.b16 %v1101, %v1100
  %v1142 = vpack.c.b16 %v1103, %v1102
  %v1143 = vpack.c.b16 %v1105, %v1104
  %v1144 = vpack.c.b16 %v1107, %v1106
  %v1145 = vpack.c.b16 %v1109, %v1108
  %v1146 = vpack.c.b16 %v1111, %v1110
  %v1147 = vpack.c.b16 %v1113, %v1112
  %v1148 = vpack.c.b16 %v1115, %v1114
  %v1149 = vpack.c.b16 %v1117, %v1116
  %v1150 = vpack.c.b16 %v1119, %v1118
  %v1151 = vpack.c.b16 %v1121, %v1120
  %v1152 = vpack.c.b16 %v1123, %v1122
  %v1153 = vpack.c.b16 %v1125, %v1124
  %v1154 = vpack.c.b16 %v1127, %v1126
  %v1155 = vpack.c.b16 %v1129, %v1128
  %v1156 = vpack.c.b16 %v1131, %v1130
  %v1157 = vpack.c.b16 %v1133, %v1132
  %1182 = vmatprep.subr.bf16.mxu0 0
  %1183 = vmatpush1.bf16.msra.mxu0 %v1134
  %1184 = vmatprep.subr.bf16.mxu0 0
  %1185 = vmatpush1.bf16.msra.mxu0 %v1135
  %1186 = vmatprep.subr.bf16.mxu0 0
  %1187 = vmatpush1.bf16.msra.mxu0 %v1136
  %1188 = vmatprep.subr.bf16.mxu0 0
  %1189 = vmatpush1.bf16.msra.mxu0 %v1137
  %1190 = vmatprep.subr.bf16.mxu0 0
  %1191 = vmatpush1.bf16.msra.mxu0 %v1138
  %1192 = vmatprep.subr.bf16.mxu0 0
  %1193 = vmatpush1.bf16.msra.mxu0 %v1139
  %1194 = vmatprep.subr.bf16.mxu0 0
  %1195 = vmatpush1.bf16.msra.mxu0 %v1140
  %1196 = vmatprep.subr.bf16.mxu0 0
  %1197 = vmatpush1.bf16.msra.mxu0 %v1141
  %1198 = vmatprep.subr.bf16.mxu0 0
  %1199 = vmatpush1.bf16.msra.mxu0 %v1142
  %1200 = vmatprep.subr.bf16.mxu0 0
  %1201 = vmatpush1.bf16.msra.mxu0 %v1143
  %1202 = vmatprep.subr.bf16.mxu0 0
  %1203 = vmatpush1.bf16.msra.mxu0 %v1144
  %1204 = vmatprep.subr.bf16.mxu0 0
  %1205 = vmatpush1.bf16.msra.mxu0 %v1145
  %1206 = vmatprep.subr.bf16.mxu0 0
  %1207 = vmatpush1.bf16.msra.mxu0 %v1146
  %1208 = vmatprep.subr.bf16.mxu0 0
  %1209 = vmatpush1.bf16.msra.mxu0 %v1147
  %1210 = vmatprep.subr.bf16.mxu0 0
  %1211 = vmatpush1.bf16.msra.mxu0 %v1148
  %1212 = vmatprep.subr.bf16.mxu0 0
  %1213 = vmatpush1.bf16.msra.mxu0 %v1149
  %1214 = vmatprep.mubr.bf16.mxu0 %v973
  %1215 = vmatmul.mubr.bf16.gmra.mrb[0].mxu0 %v965
  %v1216 = vpop.f32.mrb[0].mxu0
  %v1217 = vadd.f32 %v1036, %v1216
  %v1218 = vpop.f32.mrb[0].mxu0
  %v1219 = vpop.f32.mrb[0].mxu0
  %v1220 = vadd.f32 %v1036, %v1219
  %v1221 = vpop.f32.mrb[0].mxu0
  %1222 = vmatprep.mubr.bf16.mxu0 %v974
  %1223 = vmatmul.mubr.bf16.gmra.mrb[0].mxu0 %v966
  %v1224 = vpop.f32.mrb[0].mxu0
  %v1225 = vadd.f32 %v1036, %v1224
  %v1226 = vpop.f32.mrb[0].mxu0
  %v1227 = vpop.f32.mrb[0].mxu0
  %v1228 = vadd.f32 %v1036, %v1227
  %v1229 = vpop.f32.mrb[0].mxu0
  %1230 = vmatprep.mubr.bf16.mxu0 %v975
  %1231 = vmatmul.mubr.bf16.gmra.mrb[0].mxu0 %v967
  %v1232 = vpop.f32.mrb[0].mxu0
  %v1233 = vadd.f32 %v1036, %v1232
  %v1234 = vpop.f32.mrb[0].mxu0
  %v1235 = vpop.f32.mrb[0].mxu0
  %v1236 = vadd.f32 %v1036, %v1235
  %v1237 = vpop.f32.mrb[0].mxu0
  %1238 = vmatprep.mubr.bf16.mxu0 %v976
  %1239 = vmatmul.mubr.bf16.gmra.mrb[0].mxu0 %v968
  %v1240 = vpop.f32.mrb[0].mxu0
  %v1241 = vadd.f32 %v1036, %v1240
  %v1242 = vpop.f32.mrb[0].mxu0
  %v1243 = vpop.f32.mrb[0].mxu0
  %v1244 = vadd.f32 %v1036, %v1243
  %v1245 = vpop.f32.mrb[0].mxu0
  %1246 = vmatprep.mubr.bf16.mxu0 %v977
  %1247 = vmatmul.mubr.bf16.gmra.mrb[0].mxu0 %v969
  %v1248 = vpop.f32.mrb[0].mxu0
  %v1249 = vadd.f32 %v1036, %v1248
  %v1250 = vpop.f32.mrb[0].mxu0
  %v1251 = vpop.f32.mrb[0].mxu0
  %v1252 = vadd.f32 %v1036, %v1251
  %v1253 = vpop.f32.mrb[0].mxu0
  %1254 = vmatprep.mubr.bf16.mxu0 %v978
  %1255 = vmatmul.mubr.bf16.gmra.mrb[0].mxu0 %v970
  %v1256 = vpop.f32.mrb[0].mxu0
  %v1257 = vadd.f32 %v1036, %v1256
  %v1258 = vpop.f32.mrb[0].mxu0
  %v1259 = vpop.f32.mrb[0].mxu0
  %v1260 = vadd.f32 %v1036, %v1259
  %v1261 = vpop.f32.mrb[0].mxu0
  %1262 = vmatprep.mubr.bf16.mxu0 %v979
  %1263 = vmatmul.mubr.bf16.gmra.mrb[0].mxu0 %v971
  %v1264 = vpop.f32.mrb[0].mxu0
  %v1265 = vadd.f32 %v1036, %v1264
  %v1266 = vpop.f32.mrb[0].mxu0
  %v1267 = vpop.f32.mrb[0].mxu0
  %v1268 = vadd.f32 %v1036, %v1267
  %v1269 = vpop.f32.mrb[0].mxu0
  %1270 = vmatprep.mubr.bf16.mxu0 %v980
  %1271 = vmatmul.mubr.bf16.gmra.mrb[0].mxu0 %v972
  %v1272 = vpop.f32.mrb[0].mxu0
  %v1273 = vadd.f32 %v1036, %v1272
  %v1274 = vpop.f32.mrb[0].mxu0
  %v1275 = vpop.f32.mrb[0].mxu0
  %v1276 = vadd.f32 %v1036, %v1275
  %v1277 = vpop.f32.mrb[0].mxu0
  %1278 = vdwg.mxu0
  %1279 = vmatprep.subr.bf16.mxu0 0
  %1280 = vmatpush1.bf16.msra.mxu0 %v1150
  %1281 = vmatprep.subr.bf16.mxu0 0
  %1282 = vmatpush1.bf16.msra.mxu0 %v1151
  %1283 = vmatprep.subr.bf16.mxu0 0
  %1284 = vmatpush1.bf16.msra.mxu0 %v1152
  %1285 = vmatprep.subr.bf16.mxu0 0
  %1286 = vmatpush1.bf16.msra.mxu0 %v1153
  %1287 = vmatprep.subr.bf16.mxu0 0
  %1288 = vmatpush1.bf16.msra.mxu0 %v1154
  %1289 = vmatprep.subr.bf16.mxu0 0
  %1290 = vmatpush1.bf16.msra.mxu0 %v1155
  %1291 = vmatprep.subr.bf16.mxu0 0
  %1292 = vmatpush1.bf16.msra.mxu0 %v1156
  %1293 = vmatprep.subr.bf16.mxu0 0
  %1294 = vmatpush1.bf16.msra.mxu0 %v1157
  %1295 = vmatprep.subr.bf16.mxu0 0
  %1296 = vmatpush1.bf16.msra.mxu0 0
  %1297 = vmatprep.subr.bf16.mxu0 0
  %1298 = vmatpush1.bf16.msra.mxu0 0
  %1299 = vmatprep.subr.bf16.mxu0 0
  %1300 = vmatpush1.bf16.msra.mxu0 0
  %1301 = vmatprep.subr.bf16.mxu0 0
  %1302 = vmatpush1.bf16.msra.mxu0 0
  %1303 = vmatprep.subr.bf16.mxu0 0
  %1304 = vmatpush1.bf16.msra.mxu0 0
  %1305 = vmatprep.subr.bf16.mxu0 0
  %1306 = vmatpush1.bf16.msra.mxu0 0
  %1307 = vmatprep.subr.bf16.mxu0 0
  %1308 = vmatpush1.bf16.msra.mxu0 0
  %1309 = vmatprep.subr.bf16.mxu0 0
  %1310 = vmatpush1.bf16.msra.mxu0 0
  %1311 = vmatprep.mubr.bf16.mxu0 0
  %1312 = vmatmul.mubr.bf16.gmra.mrb[0].mxu0 %v796
  %v1313 = vpop.f32.mrb[0].mxu0
  %v1314 = vadd.f32 %v1217, %v1313
  %v1315 = vpop.f32.mrb[0].mxu0
  %v1316 = vpop.f32.mrb[0].mxu0
  %v1317 = vadd.f32 %v1220, %v1316
  %v1318 = vpop.f32.mrb[0].mxu0
  %1319 = vmatprep.mubr.bf16.mxu0 0
  %1320 = vmatmul.mubr.bf16.gmra.mrb[0].mxu0 %v797
  %v1321 = vpop.f32.mrb[0].mxu0
  %v1322 = vadd.f32 %v1225, %v1321
  %v1323 = vpop.f32.mrb[0].mxu0
  %v1324 = vpop.f32.mrb[0].mxu0
  %v1325 = vadd.f32 %v1228, %v1324
  %v1326 = vpop.f32.mrb[0].mxu0
  %1327 = vmatprep.mubr.bf16.mxu0 0
  %1328 = vmatmul.mubr.bf16.gmra.mrb[0].mxu0 %v798
  %v1329 = vpop.f32.mrb[0].mxu0
  %v1330 = vadd.f32 %v1233, %v1329
  %v1331 = vpop.f32.mrb[0].mxu0
  %v1332 = vpop.f32.mrb[0].mxu0
  %v1333 = vadd.f32 %v1236, %v1332
  %v1334 = vpop.f32.mrb[0].mxu0
  %1335 = vmatprep.mubr.bf16.mxu0 0
  %1336 = vmatmul.mubr.bf16.gmra.mrb[0].mxu0 %v799
  %v1337 = vpop.f32.mrb[0].mxu0
  %v1338 = vadd.f32 %v1241, %v1337
  %v1339 = vpop.f32.mrb[0].mxu0
  %v1340 = vpop.f32.mrb[0].mxu0
  %v1341 = vadd.f32 %v1244, %v1340
  %v1342 = vpop.f32.mrb[0].mxu0
  %1343 = vmatprep.mubr.bf16.mxu0 0
  %1344 = vmatmul.mubr.bf16.gmra.mrb[0].mxu0 %v800
  %v1345 = vpop.f32.mrb[0].mxu0
  %v1346 = vadd.f32 %v1249, %v1345
  %v1347 = vpop.f32.mrb[0].mxu0
  %v1348 = vpop.f32.mrb[0].mxu0
  %v1349 = vadd.f32 %v1252, %v1348
  %v1350 = vpop.f32.mrb[0].mxu0
  %1351 = vmatprep.mubr.bf16.mxu0 0
  %1352 = vmatmul.mubr.bf16.gmra.mrb[0].mxu0 %v801
  %v1353 = vpop.f32.mrb[0].mxu0
  %v1354 = vadd.f32 %v1257, %v1353
  %v1355 = vpop.f32.mrb[0].mxu0
  %v1356 = vpop.f32.mrb[0].mxu0
  %v1357 = vadd.f32 %v1260, %v1356
  %v1358 = vpop.f32.mrb[0].mxu0
  %1359 = vmatprep.mubr.bf16.mxu0 0
  %1360 = vmatmul.mubr.bf16.gmra.mrb[0].mxu0 %v802
  %v1361 = vpop.f32.mrb[0].mxu0
  %v1362 = vadd.f32 %v1265, %v1361
  %v1363 = vpop.f32.mrb[0].mxu0
  %v1364 = vpop.f32.mrb[0].mxu0
  %v1365 = vadd.f32 %v1268, %v1364
  %v1366 = vpop.f32.mrb[0].mxu0
  %1367 = vmatprep.mubr.bf16.mxu0 0
  %1368 = vmatmul.mubr.bf16.gmra.mrb[0].mxu0 %v803
  %v1369 = vpop.f32.mrb[0].mxu0
  %v1370 = vadd.f32 %v1273, %v1369
  %v1371 = vpop.f32.mrb[0].mxu0
  %v1372 = vpop.f32.mrb[0].mxu0
  %v1373 = vadd.f32 %v1276, %v1372
  %v1374 = vpop.f32.mrb[0].mxu0
  %1375 = vdwg.mxu0
  %v1376 = vmax.f32 %v1314, 0.0
  %v1377 = vmax.f32 %v1317, 0.0
  %v1378 = vmax.f32 %v1322, 0.0
  %v1379 = vmax.f32 %v1325, 0.0
  %v1380 = vmax.f32 %v1330, 0.0
  %v1381 = vmax.f32 %v1333, 0.0
  %v1382 = vmax.f32 %v1338, 0.0
  %v1383 = vmax.f32 %v1341, 0.0
  %v1384 = vmax.f32 %v1346, 0.0
  %v1385 = vmax.f32 %v1349, 0.0
  %v1386 = vmax.f32 %v1354, 0.0
  %v1387 = vmax.f32 %v1357, 0.0
  %v1388 = vmax.f32 %v1362, 0.0
  %v1389 = vmax.f32 %v1365, 0.0
  %v1390 = vmax.f32 %v1370, 0.0
  %v1391 = vmax.f32 %v1373, 0.0
  %v1392 = vpack.c.bf16 %v1377, %v1376
  %v1393 = vpack.c.bf16 %v1379, %v1378
  %v1394 = vpack.c.bf16 %v1381, %v1380
  %v1395 = vpack.c.bf16 %v1383, %v1382
  %v1396 = vpack.c.bf16 %v1385, %v1384
  %v1397 = vpack.c.bf16 %v1387, %v1386
  %v1398 = vpack.c.bf16 %v1389, %v1388
  %v1399 = vpack.c.bf16 %v1391, %v1390
  %1400 = vmatprep.subr.bf16.mxu0 0
  %1401 = vmatpush1.bf16.msra.mxu0 %v1392
  %1402 = vmatprep.subr.bf16.mxu0 0
  %1403 = vmatpush1.bf16.msra.mxu0 %v1393
  %1404 = vmatprep.subr.bf16.mxu0 0
  %1405 = vmatpush1.bf16.msra.mxu0 %v1394
  %1406 = vmatprep.subr.bf16.mxu0 0
  %1407 = vmatpush1.bf16.msra.mxu0 %v1395
  %1408 = vmatprep.subr.bf16.mxu0 0
  %1409 = vmatpush1.bf16.msra.mxu0 %v1396
  %1410 = vmatprep.subr.bf16.mxu0 0
  %1411 = vmatpush1.bf16.msra.mxu0 %v1397
  %1412 = vmatprep.subr.bf16.mxu0 0
  %1413 = vmatpush1.bf16.msra.mxu0 %v1398
  %1414 = vmatprep.subr.bf16.mxu0 0
  %1415 = vmatpush1.bf16.msra.mxu0 %v1399
  %1416 = vmatprep.subr.bf16.mxu0 0
  %1417 = vmatpush1.bf16.msra.mxu0 0
  %1418 = vmatprep.subr.bf16.mxu0 0
  %1419 = vmatpush1.bf16.msra.mxu0 0
  %1420 = vmatprep.subr.bf16.mxu0 0
  %1421 = vmatpush1.bf16.msra.mxu0 0
  %1422 = vmatprep.subr.bf16.mxu0 0
  %1423 = vmatpush1.bf16.msra.mxu0 0
  %1424 = vmatprep.subr.bf16.mxu0 0
  %1425 = vmatpush1.bf16.msra.mxu0 0
  %1426 = vmatprep.subr.bf16.mxu0 0
  %1427 = vmatpush1.bf16.msra.mxu0 0
  %1428 = vmatprep.subr.bf16.mxu0 0
  %1429 = vmatpush1.bf16.msra.mxu0 0
  %1430 = vmatprep.subr.bf16.mxu0 0
  %1431 = vmatpush1.bf16.msra.mxu0 0
  %1432 = vmatprep.mubr.bf16.mxu0 0
  %1433 = vmatmul.mubr.bf16.gmra.mrb[0].mxu0 %v130
  %v1434 = vpop.f32.mrb[0].mxu0
  %v1435 = vadd.f32 0.0, %v1434
  %v1436 = vpop.f32.mrb[0].mxu0
  %v1437 = vpop.f32.mrb[0].mxu0
  %v1438 = vadd.f32 0.0, %v1437
  %v1439 = vpop.f32.mrb[0].mxu0
  %1440 = vmatprep.mubr.bf16.mxu0 0
  %1441 = vmatmul.mubr.bf16.gmra.mrb[0].mxu0 %v131
  %v1442 = vpop.f32.mrb[0].mxu0
  %v1443 = vadd.f32 0.0, %v1442
  %v1444 = vpop.f32.mrb[0].mxu0
  %v1445 = vpop.f32.mrb[0].mxu0
  %v1446 = vadd.f32 0.0, %v1445
  %v1447 = vpop.f32.mrb[0].mxu0
  %1448 = vmatprep.mubr.bf16.mxu0 0
  %1449 = vmatmul.mubr.bf16.gmra.mrb[0].mxu0 %v132
  %v1450 = vpop.f32.mrb[0].mxu0
  %v1451 = vadd.f32 0.0, %v1450
  %v1452 = vpop.f32.mrb[0].mxu0
  %v1453 = vpop.f32.mrb[0].mxu0
  %v1454 = vadd.f32 0.0, %v1453
  %v1455 = vpop.f32.mrb[0].mxu0
  %1456 = vmatprep.mubr.bf16.mxu0 0
  %1457 = vmatmul.mubr.bf16.gmra.mrb[0].mxu0 %v133
  %v1458 = vpop.f32.mrb[0].mxu0
  %v1459 = vadd.f32 0.0, %v1458
  %v1460 = vpop.f32.mrb[0].mxu0
  %v1461 = vpop.f32.mrb[0].mxu0
  %v1462 = vadd.f32 0.0, %v1461
  %v1463 = vpop.f32.mrb[0].mxu0
  %1464 = vmatprep.mubr.bf16.mxu0 0
  %1465 = vmatmul.mubr.bf16.gmra.mrb[0].mxu0 %v134
  %v1466 = vpop.f32.mrb[0].mxu0
  %v1467 = vadd.f32 0.0, %v1466
  %v1468 = vpop.f32.mrb[0].mxu0
  %v1469 = vpop.f32.mrb[0].mxu0
  %v1470 = vadd.f32 0.0, %v1469
  %v1471 = vpop.f32.mrb[0].mxu0
  %1472 = vmatprep.mubr.bf16.mxu0 0
  %1473 = vmatmul.mubr.bf16.gmra.mrb[0].mxu0 %v135
  %v1474 = vpop.f32.mrb[0].mxu0
  %v1475 = vadd.f32 0.0, %v1474
  %v1476 = vpop.f32.mrb[0].mxu0
  %v1477 = vpop.f32.mrb[0].mxu0
  %v1478 = vadd.f32 0.0, %v1477
  %v1479 = vpop.f32.mrb[0].mxu0
  %1480 = vmatprep.mubr.bf16.mxu0 0
  %1481 = vmatmul.mubr.bf16.gmra.mrb[0].mxu0 %v136
  %v1482 = vpop.f32.mrb[0].mxu0
  %v1483 = vadd.f32 0.0, %v1482
  %v1484 = vpop.f32.mrb[0].mxu0
  %v1485 = vpop.f32.mrb[0].mxu0
  %v1486 = vadd.f32 0.0, %v1485
  %v1487 = vpop.f32.mrb[0].mxu0
  %1488 = vmatprep.mubr.bf16.mxu0 0
  %1489 = vmatmul.mubr.bf16.gmra.mrb[0].mxu0 %v137
  %v1490 = vpop.f32.mrb[0].mxu0
  %v1491 = vadd.f32 0.0, %v1490
  %v1492 = vpop.f32.mrb[0].mxu0
  %v1493 = vpop.f32.mrb[0].mxu0
  %v1494 = vadd.f32 0.0, %v1493
  %v1495 = vpop.f32.mrb[0].mxu0
  %1496 = vmatprep.mubr.bf16.mxu0 0
  %1497 = vmatmul.mubr.bf16.gmra.mrb[0].mxu0 %v138
  %v1498 = vpop.f32.mrb[0].mxu0
  %v1499 = vadd.f32 0.0, %v1498
  %v1500 = vpop.f32.mrb[0].mxu0
  %v1501 = vpop.f32.mrb[0].mxu0
  %v1502 = vadd.f32 0.0, %v1501
  %v1503 = vpop.f32.mrb[0].mxu0
  %1504 = vmatprep.mubr.bf16.mxu0 0
  %1505 = vmatmul.mubr.bf16.gmra.mrb[0].mxu0 %v139
  %v1506 = vpop.f32.mrb[0].mxu0
  %v1507 = vadd.f32 0.0, %v1506
  %v1508 = vpop.f32.mrb[0].mxu0
  %v1509 = vpop.f32.mrb[0].mxu0
  %v1510 = vadd.f32 0.0, %v1509
  %v1511 = vpop.f32.mrb[0].mxu0
  %1512 = vmatprep.mubr.bf16.mxu0 0
  %1513 = vmatmul.mubr.bf16.gmra.mrb[0].mxu0 %v140
  %v1514 = vpop.f32.mrb[0].mxu0
  %v1515 = vadd.f32 0.0, %v1514
  %v1516 = vpop.f32.mrb[0].mxu0
  %v1517 = vpop.f32.mrb[0].mxu0
  %v1518 = vadd.f32 0.0, %v1517
  %v1519 = vpop.f32.mrb[0].mxu0
  %1520 = vmatprep.mubr.bf16.mxu0 0
  %1521 = vmatmul.mubr.bf16.gmra.mrb[0].mxu0 %v141
  %v1522 = vpop.f32.mrb[0].mxu0
  %v1523 = vadd.f32 0.0, %v1522
  %v1524 = vpop.f32.mrb[0].mxu0
  %v1525 = vpop.f32.mrb[0].mxu0
  %v1526 = vadd.f32 0.0, %v1525
  %v1527 = vpop.f32.mrb[0].mxu0
  %1528 = vmatprep.mubr.bf16.mxu0 0
  %1529 = vmatmul.mubr.bf16.gmra.mrb[0].mxu0 %v142
  %v1530 = vpop.f32.mrb[0].mxu0
  %v1531 = vadd.f32 0.0, %v1530
  %v1532 = vpop.f32.mrb[0].mxu0
  %v1533 = vpop.f32.mrb[0].mxu0
  %v1534 = vadd.f32 0.0, %v1533
  %v1535 = vpop.f32.mrb[0].mxu0
  %1536 = vmatprep.mubr.bf16.mxu0 0
  %1537 = vmatmul.mubr.bf16.gmra.mrb[0].mxu0 %v143
  %v1538 = vpop.f32.mrb[0].mxu0
  %v1539 = vadd.f32 0.0, %v1538
  %v1540 = vpop.f32.mrb[0].mxu0
  %v1541 = vpop.f32.mrb[0].mxu0
  %v1542 = vadd.f32 0.0, %v1541
  %v1543 = vpop.f32.mrb[0].mxu0
  %1544 = vmatprep.mubr.bf16.mxu0 0
  %1545 = vmatmul.mubr.bf16.gmra.mrb[0].mxu0 %v144
  %v1546 = vpop.f32.mrb[0].mxu0
  %v1547 = vadd.f32 0.0, %v1546
  %v1548 = vpop.f32.mrb[0].mxu0
  %v1549 = vpop.f32.mrb[0].mxu0
  %v1550 = vadd.f32 0.0, %v1549
  %v1551 = vpop.f32.mrb[0].mxu0
  %1552 = vmatprep.mubr.bf16.mxu0 0
  %1553 = vmatmul.mubr.bf16.gmra.mrb[0].mxu0 %v145
  %v1554 = vpop.f32.mrb[0].mxu0
  %v1555 = vadd.f32 0.0, %v1554
  %v1556 = vpop.f32.mrb[0].mxu0
  %v1557 = vpop.f32.mrb[0].mxu0
  %v1558 = vadd.f32 0.0, %v1557
  %v1559 = vpop.f32.mrb[0].mxu0
  %1560 = vdwg.mxu0
  %v1561 = vpack.c.bf16 %v1438, %v1435
  %v1562 = vpack.c.bf16 %v1446, %v1443
  %v1563 = vpack.c.bf16 %v1454, %v1451
  %v1564 = vpack.c.bf16 %v1462, %v1459
  %v1565 = vpack.c.bf16 %v1470, %v1467
  %v1566 = vpack.c.bf16 %v1478, %v1475
  %v1567 = vpack.c.bf16 %v1486, %v1483
  %v1568 = vpack.c.bf16 %v1494, %v1491
  %v1569 = vpack.c.bf16 %v1502, %v1499
  %v1570 = vpack.c.bf16 %v1510, %v1507
  %v1571 = vpack.c.bf16 %v1518, %v1515
  %v1572 = vpack.c.bf16 %v1526, %v1523
  %v1573 = vpack.c.bf16 %v1534, %v1531
  %v1574 = vpack.c.bf16 %v1542, %v1539
  %v1575 = vpack.c.bf16 %v1550, %v1547
  %v1576 = vpack.c.bf16 %v1558, %v1555
  %s1577 = scalar_lea.vmem %s2, 384
  %v1578 = vld [vmem:[%s1577] sm:$0xf]
  %v1579 = vld [vmem:[%s1577 + $0x4] sm:$0xf]
  %v1580 = vld [vmem:[%s1577 + $0x8] sm:$0xf]
  %v1581 = vld [vmem:[%s1577 + $0xc] sm:$0xf]
  %v1582 = vld [vmem:[%s1577 + $0x10] sm:$0xf]
  %v1583 = vld [vmem:[%s1577 + $0x14] sm:$0xf]
  %v1584 = vld [vmem:[%s1577 + $0x18] sm:$0xf]
  %v1585 = vld [vmem:[%s1577 + $0x1c] sm:$0xf]
  %v1586 = vld [vmem:[%s1577 + $0x20] sm:$0xf]
  %v1587 = vld [vmem:[%s1577 + $0x24] sm:$0xf]
  %v1588 = vld [vmem:[%s1577 + $0x28] sm:$0xf]
  %v1589 = vld [vmem:[%s1577 + $0x2c] sm:$0xf]
  %v1590 = vld [vmem:[%s1577 + $0x30] sm:$0xf]
  %v1591 = vld [vmem:[%s1577 + $0x34] sm:$0xf]
  %v1592 = vld [vmem:[%s1577 + $0x38] sm:$0xf]
  %v1593 = vld [vmem:[%s1577 + $0x3c] sm:$0xf]
  %v1594 = vld [vmem:[%s1577 + $0x40] sm:$0xf]
  %v1595 = vld [vmem:[%s1577 + $0x44] sm:$0xf]
  %v1596 = vld [vmem:[%s1577 + $0x48] sm:$0xf]
  %v1597 = vld [vmem:[%s1577 + $0x4c] sm:$0xf]
  %v1598 = vld [vmem:[%s1577 + $0x50] sm:$0xf]
  %v1599 = vld [vmem:[%s1577 + $0x54] sm:$0xf]
  %v1600 = vld [vmem:[%s1577 + $0x58] sm:$0xf]
  %v1601 = vld [vmem:[%s1577 + $0x5c] sm:$0xf]
  %v1602 = vld [vmem:[%s1577 + $0x60] sm:$0xf]
  %v1603 = vld [vmem:[%s1577 + $0x64] sm:$0xf]
  %v1604 = vld [vmem:[%s1577 + $0x68] sm:$0xf]
  %v1605 = vld [vmem:[%s1577 + $0x6c] sm:$0xf]
  %v1606 = vld [vmem:[%s1577 + $0x70] sm:$0xf]
  %v1607 = vld [vmem:[%s1577 + $0x74] sm:$0xf]
  %v1608 = vld [vmem:[%s1577 + $0x78] sm:$0xf]
  %v1609 = vld [vmem:[%s1577 + $0x7c] sm:$0xf]
  %v1610 = vld [vmem:[%s1577 + $0x80] sm:$0xf]
  %v1611 = vld [vmem:[%s1577 + $0x84] sm:$0xf]
  %v1612 = vld [vmem:[%s1577 + $0x88] sm:$0xf]
  %v1613 = vld [vmem:[%s1577 + $0x8c] sm:$0xf]
  %v1614 = vld [vmem:[%s1577 + $0x90] sm:$0xf]
  %v1615 = vld [vmem:[%s1577 + $0x94] sm:$0xf]
  %v1616 = vld [vmem:[%s1577 + $0x98] sm:$0xf]
  %v1617 = vld [vmem:[%s1577 + $0x9c] sm:$0xf]
  %v1618 = vld [vmem:[%s1577 + $0xa0] sm:$0xf]
  %v1619 = vld [vmem:[%s1577 + $0xa4] sm:$0xf]
  %v1620 = vld [vmem:[%s1577 + $0xa8] sm:$0xf]
  %v1621 = vld [vmem:[%s1577 + $0xac] sm:$0xf]
  %v1622 = vld [vmem:[%s1577 + $0xb0] sm:$0xf]
  %v1623 = vld [vmem:[%s1577 + $0xb4] sm:$0xf]
  %v1624 = vld [vmem:[%s1577 + $0xb8] sm:$0xf]
  %v1625 = vld [vmem:[%s1577 + $0xbc] sm:$0xf]
  %s1626 = scalar_lea.vmem %s3, 2
  %v1627 = vld [vmem:[%s1626] sm:$0x1]
  %v1629 = vlaneseq
  %v1630 = vshrl.u32 %v1629, 7
  %v1631 = vsub.s32 0, %v1630
  %v1632 = vrot.slane %v1627, %v1631
  %v1682 = vunpack.c.l.b16 %v1578
  %v1683 = vunpack.c.l.b16 %v1579
  %v1684 = vunpack.c.l.b16 %v1580
  %v1685 = vunpack.c.l.b16 %v1581
  %v1686 = vunpack.c.l.b16 %v1582
  %v1687 = vunpack.c.l.b16 %v1583
  %v1688 = vunpack.c.l.b16 %v1584
  %v1689 = vunpack.c.l.b16 %v1585
  %v1690 = vunpack.c.l.b16 %v1586
  %v1691 = vunpack.c.l.b16 %v1587
  %v1692 = vunpack.c.l.b16 %v1588
  %v1693 = vunpack.c.l.b16 %v1589
  %v1694 = vunpack.c.l.b16 %v1590
  %v1695 = vunpack.c.l.b16 %v1591
  %v1696 = vunpack.c.l.b16 %v1592
  %v1697 = vunpack.c.l.b16 %v1593
  %v1698 = vunpack.c.l.b16 %v1594
  %v1699 = vunpack.c.l.b16 %v1595
  %v1700 = vunpack.c.l.b16 %v1596
  %v1701 = vunpack.c.l.b16 %v1597
  %v1702 = vunpack.c.l.b16 %v1598
  %v1703 = vunpack.c.l.b16 %v1599
  %v1704 = vunpack.c.l.b16 %v1600
  %v1705 = vunpack.c.l.b16 %v1601
  %v1706 = vunpack.c.l.b16 %v1602
  %v1707 = vunpack.c.l.b16 %v1603
  %v1708 = vunpack.c.l.b16 %v1604
  %v1709 = vunpack.c.l.b16 %v1605
  %v1710 = vunpack.c.l.b16 %v1606
  %v1711 = vunpack.c.l.b16 %v1607
  %v1712 = vunpack.c.l.b16 %v1608
  %v1713 = vunpack.c.l.b16 %v1609
  %v1714 = vunpack.c.l.b16 %v1610
  %v1715 = vunpack.c.l.b16 %v1611
  %v1716 = vunpack.c.l.b16 %v1612
  %v1717 = vunpack.c.l.b16 %v1613
  %v1718 = vunpack.c.l.b16 %v1614
  %v1719 = vunpack.c.l.b16 %v1615
  %v1720 = vunpack.c.l.b16 %v1616
  %v1721 = vunpack.c.l.b16 %v1617
  %v1722 = vunpack.c.l.b16 %v1618
  %v1723 = vunpack.c.l.b16 %v1619
  %v1724 = vunpack.c.l.b16 %v1620
  %v1725 = vunpack.c.l.b16 %v1621
  %v1726 = vunpack.c.l.b16 %v1622
  %v1727 = vunpack.c.l.b16 %v1623
  %v1728 = vunpack.c.l.b16 %v1624
  %v1729 = vunpack.c.l.b16 %v1625
  %v1730 = vpack.c.b16 %v1683, %v1682
  %v1731 = vpack.c.b16 %v1685, %v1684
  %v1732 = vpack.c.b16 %v1687, %v1686
  %v1733 = vpack.c.b16 %v1689, %v1688
  %v1734 = vpack.c.b16 %v1691, %v1690
  %v1735 = vpack.c.b16 %v1693, %v1692
  %v1736 = vpack.c.b16 %v1695, %v1694
  %v1737 = vpack.c.b16 %v1697, %v1696
  %v1738 = vpack.c.b16 %v1699, %v1698
  %v1739 = vpack.c.b16 %v1701, %v1700
  %v1740 = vpack.c.b16 %v1703, %v1702
  %v1741 = vpack.c.b16 %v1705, %v1704
  %v1742 = vpack.c.b16 %v1707, %v1706
  %v1743 = vpack.c.b16 %v1709, %v1708
  %v1744 = vpack.c.b16 %v1711, %v1710
  %v1745 = vpack.c.b16 %v1713, %v1712
  %v1746 = vpack.c.b16 %v1715, %v1714
  %v1747 = vpack.c.b16 %v1717, %v1716
  %v1748 = vpack.c.b16 %v1719, %v1718
  %v1749 = vpack.c.b16 %v1721, %v1720
  %v1750 = vpack.c.b16 %v1723, %v1722
  %v1751 = vpack.c.b16 %v1725, %v1724
  %v1752 = vpack.c.b16 %v1727, %v1726
  %v1753 = vpack.c.b16 %v1729, %v1728
  %1778 = vmatprep.subr.bf16.mxu0 0
  %1779 = vmatpush1.bf16.msra.mxu0 %v1730
  %1780 = vmatprep.subr.bf16.mxu0 0
  %1781 = vmatpush1.bf16.msra.mxu0 %v1731
  %1782 = vmatprep.subr.bf16.mxu0 0
  %1783 = vmatpush1.bf16.msra.mxu0 %v1732
  %1784 = vmatprep.subr.bf16.mxu0 0
  %1785 = vmatpush1.bf16.msra.mxu0 %v1733
  %1786 = vmatprep.subr.bf16.mxu0 0
  %1787 = vmatpush1.bf16.msra.mxu0 %v1734
  %1788 = vmatprep.subr.bf16.mxu0 0
  %1789 = vmatpush1.bf16.msra.mxu0 %v1735
  %1790 = vmatprep.subr.bf16.mxu0 0
  %1791 = vmatpush1.bf16.msra.mxu0 %v1736
  %1792 = vmatprep.subr.bf16.mxu0 0
  %1793 = vmatpush1.bf16.msra.mxu0 %v1737
  %1794 = vmatprep.subr.bf16.mxu0 0
  %1795 = vmatpush1.bf16.msra.mxu0 %v1738
  %1796 = vmatprep.subr.bf16.mxu0 0
  %1797 = vmatpush1.bf16.msra.mxu0 %v1739
  %1798 = vmatprep.subr.bf16.mxu0 0
  %1799 = vmatpush1.bf16.msra.mxu0 %v1740
  %1800 = vmatprep.subr.bf16.mxu0 0
  %1801 = vmatpush1.bf16.msra.mxu0 %v1741
  %1802 = vmatprep.subr.bf16.mxu0 0
  %1803 = vmatpush1.bf16.msra.mxu0 %v1742
  %1804 = vmatprep.subr.bf16.mxu0 0
  %1805 = vmatpush1.bf16.msra.mxu0 %v1743
  %1806 = vmatprep.subr.bf16.mxu0 0
  %1807 = vmatpush1.bf16.msra.mxu0 %v1744
  %1808 = vmatprep.subr.bf16.mxu0 0
  %1809 = vmatpush1.bf16.msra.mxu0 %v1745
  %1810 = vmatprep.mubr.bf16.mxu0 %v1569
  %1811 = vmatmul.mubr.bf16.gmra.mrb[0].mxu0 %v1561
  %v1812 = vpop.f32.mrb[0].mxu0
  %v1813 = vadd.f32 %v1632, %v1812
  %v1814 = vpop.f32.mrb[0].mxu0
  %v1815 = vpop.f32.mrb[0].mxu0
  %v1816 = vadd.f32 %v1632, %v1815
  %v1817 = vpop.f32.mrb[0].mxu0
  %1818 = vmatprep.mubr.bf16.mxu0 %v1570
  %1819 = vmatmul.mubr.bf16.gmra.mrb[0].mxu0 %v1562
  %v1820 = vpop.f32.mrb[0].mxu0
  %v1821 = vadd.f32 %v1632, %v1820
  %v1822 = vpop.f32.mrb[0].mxu0
  %v1823 = vpop.f32.mrb[0].mxu0
  %v1824 = vadd.f32 %v1632, %v1823
  %v1825 = vpop.f32.mrb[0].mxu0
  %1826 = vmatprep.mubr.bf16.mxu0 %v1571
  %1827 = vmatmul.mubr.bf16.gmra.mrb[0].mxu0 %v1563
  %v1828 = vpop.f32.mrb[0].mxu0
  %v1829 = vadd.f32 %v1632, %v1828
  %v1830 = vpop.f32.mrb[0].mxu0
  %v1831 = vpop.f32.mrb[0].mxu0
  %v1832 = vadd.f32 %v1632, %v1831
  %v1833 = vpop.f32.mrb[0].mxu0
  %1834 = vmatprep.mubr.bf16.mxu0 %v1572
  %1835 = vmatmul.mubr.bf16.gmra.mrb[0].mxu0 %v1564
  %v1836 = vpop.f32.mrb[0].mxu0
  %v1837 = vadd.f32 %v1632, %v1836
  %v1838 = vpop.f32.mrb[0].mxu0
  %v1839 = vpop.f32.mrb[0].mxu0
  %v1840 = vadd.f32 %v1632, %v1839
  %v1841 = vpop.f32.mrb[0].mxu0
  %1842 = vmatprep.mubr.bf16.mxu0 %v1573
  %1843 = vmatmul.mubr.bf16.gmra.mrb[0].mxu0 %v1565
  %v1844 = vpop.f32.mrb[0].mxu0
  %v1845 = vadd.f32 %v1632, %v1844
  %v1846 = vpop.f32.mrb[0].mxu0
  %v1847 = vpop.f32.mrb[0].mxu0
  %v1848 = vadd.f32 %v1632, %v1847
  %v1849 = vpop.f32.mrb[0].mxu0
  %1850 = vmatprep.mubr.bf16.mxu0 %v1574
  %1851 = vmatmul.mubr.bf16.gmra.mrb[0].mxu0 %v1566
  %v1852 = vpop.f32.mrb[0].mxu0
  %v1853 = vadd.f32 %v1632, %v1852
  %v1854 = vpop.f32.mrb[0].mxu0
  %v1855 = vpop.f32.mrb[0].mxu0
  %v1856 = vadd.f32 %v1632, %v1855
  %v1857 = vpop.f32.mrb[0].mxu0
  %1858 = vmatprep.mubr.bf16.mxu0 %v1575
  %1859 = vmatmul.mubr.bf16.gmra.mrb[0].mxu0 %v1567
  %v1860 = vpop.f32.mrb[0].mxu0
  %v1861 = vadd.f32 %v1632, %v1860
  %v1862 = vpop.f32.mrb[0].mxu0
  %v1863 = vpop.f32.mrb[0].mxu0
  %v1864 = vadd.f32 %v1632, %v1863
  %v1865 = vpop.f32.mrb[0].mxu0
  %1866 = vmatprep.mubr.bf16.mxu0 %v1576
  %1867 = vmatmul.mubr.bf16.gmra.mrb[0].mxu0 %v1568
  %v1868 = vpop.f32.mrb[0].mxu0
  %v1869 = vadd.f32 %v1632, %v1868
  %v1870 = vpop.f32.mrb[0].mxu0
  %v1871 = vpop.f32.mrb[0].mxu0
  %v1872 = vadd.f32 %v1632, %v1871
  %v1873 = vpop.f32.mrb[0].mxu0
  %1874 = vdwg.mxu0
  %1875 = vmatprep.subr.bf16.mxu0 0
  %1876 = vmatpush1.bf16.msra.mxu0 %v1746
  %1877 = vmatprep.subr.bf16.mxu0 0
  %1878 = vmatpush1.bf16.msra.mxu0 %v1747
  %1879 = vmatprep.subr.bf16.mxu0 0
  %1880 = vmatpush1.bf16.msra.mxu0 %v1748
  %1881 = vmatprep.subr.bf16.mxu0 0
  %1882 = vmatpush1.bf16.msra.mxu0 %v1749
  %1883 = vmatprep.subr.bf16.mxu0 0
  %1884 = vmatpush1.bf16.msra.mxu0 %v1750
  %1885 = vmatprep.subr.bf16.mxu0 0
  %1886 = vmatpush1.bf16.msra.mxu0 %v1751
  %1887 = vmatprep.subr.bf16.mxu0 0
  %1888 = vmatpush1.bf16.msra.mxu0 %v1752
  %1889 = vmatprep.subr.bf16.mxu0 0
  %1890 = vmatpush1.bf16.msra.mxu0 %v1753
  %1891 = vmatprep.subr.bf16.mxu0 0
  %1892 = vmatpush1.bf16.msra.mxu0 0
  %1893 = vmatprep.subr.bf16.mxu0 0
  %1894 = vmatpush1.bf16.msra.mxu0 0
  %1895 = vmatprep.subr.bf16.mxu0 0
  %1896 = vmatpush1.bf16.msra.mxu0 0
  %1897 = vmatprep.subr.bf16.mxu0 0
  %1898 = vmatpush1.bf16.msra.mxu0 0
  %1899 = vmatprep.subr.bf16.mxu0 0
  %1900 = vmatpush1.bf16.msra.mxu0 0
  %1901 = vmatprep.subr.bf16.mxu0 0
  %1902 = vmatpush1.bf16.msra.mxu0 0
  %1903 = vmatprep.subr.bf16.mxu0 0
  %1904 = vmatpush1.bf16.msra.mxu0 0
  %1905 = vmatprep.subr.bf16.mxu0 0
  %1906 = vmatpush1.bf16.msra.mxu0 0
  %1907 = vmatprep.mubr.bf16.mxu0 0
  %1908 = vmatmul.mubr.bf16.gmra.mrb[0].mxu0 %v1392
  %v1909 = vpop.f32.mrb[0].mxu0
  %v1910 = vadd.f32 %v1813, %v1909
  %v1911 = vpop.f32.mrb[0].mxu0
  %v1912 = vpop.f32.mrb[0].mxu0
  %v1913 = vadd.f32 %v1816, %v1912
  %v1914 = vpop.f32.mrb[0].mxu0
  %1915 = vmatprep.mubr.bf16.mxu0 0
  %1916 = vmatmul.mubr.bf16.gmra.mrb[0].mxu0 %v1393
  %v1917 = vpop.f32.mrb[0].mxu0
  %v1918 = vadd.f32 %v1821, %v1917
  %v1919 = vpop.f32.mrb[0].mxu0
  %v1920 = vpop.f32.mrb[0].mxu0
  %v1921 = vadd.f32 %v1824, %v1920
  %v1922 = vpop.f32.mrb[0].mxu0
  %1923 = vmatprep.mubr.bf16.mxu0 0
  %1924 = vmatmul.mubr.bf16.gmra.mrb[0].mxu0 %v1394
  %v1925 = vpop.f32.mrb[0].mxu0
  %v1926 = vadd.f32 %v1829, %v1925
  %v1927 = vpop.f32.mrb[0].mxu0
  %v1928 = vpop.f32.mrb[0].mxu0
  %v1929 = vadd.f32 %v1832, %v1928
  %v1930 = vpop.f32.mrb[0].mxu0
  %1931 = vmatprep.mubr.bf16.mxu0 0
  %1932 = vmatmul.mubr.bf16.gmra.mrb[0].mxu0 %v1395
  %v1933 = vpop.f32.mrb[0].mxu0
  %v1934 = vadd.f32 %v1837, %v1933
  %v1935 = vpop.f32.mrb[0].mxu0
  %v1936 = vpop.f32.mrb[0].mxu0
  %v1937 = vadd.f32 %v1840, %v1936
  %v1938 = vpop.f32.mrb[0].mxu0
  %1939 = vmatprep.mubr.bf16.mxu0 0
  %1940 = vmatmul.mubr.bf16.gmra.mrb[0].mxu0 %v1396
  %v1941 = vpop.f32.mrb[0].mxu0
  %v1942 = vadd.f32 %v1845, %v1941
  %v1943 = vpop.f32.mrb[0].mxu0
  %v1944 = vpop.f32.mrb[0].mxu0
  %v1945 = vadd.f32 %v1848, %v1944
  %v1946 = vpop.f32.mrb[0].mxu0
  %1947 = vmatprep.mubr.bf16.mxu0 0
  %1948 = vmatmul.mubr.bf16.gmra.mrb[0].mxu0 %v1397
  %v1949 = vpop.f32.mrb[0].mxu0
  %v1950 = vadd.f32 %v1853, %v1949
  %v1951 = vpop.f32.mrb[0].mxu0
  %v1952 = vpop.f32.mrb[0].mxu0
  %v1953 = vadd.f32 %v1856, %v1952
  %v1954 = vpop.f32.mrb[0].mxu0
  %1955 = vmatprep.mubr.bf16.mxu0 0
  %1956 = vmatmul.mubr.bf16.gmra.mrb[0].mxu0 %v1398
  %v1957 = vpop.f32.mrb[0].mxu0
  %v1958 = vadd.f32 %v1861, %v1957
  %v1959 = vpop.f32.mrb[0].mxu0
  %v1960 = vpop.f32.mrb[0].mxu0
  %v1961 = vadd.f32 %v1864, %v1960
  %v1962 = vpop.f32.mrb[0].mxu0
  %1963 = vmatprep.mubr.bf16.mxu0 0
  %1964 = vmatmul.mubr.bf16.gmra.mrb[0].mxu0 %v1399
  %v1965 = vpop.f32.mrb[0].mxu0
  %v1966 = vadd.f32 %v1869, %v1965
  %v1967 = vpop.f32.mrb[0].mxu0
  %v1968 = vpop.f32.mrb[0].mxu0
  %v1969 = vadd.f32 %v1872, %v1968
  %v1970 = vpop.f32.mrb[0].mxu0
  %1971 = vdwg.mxu0
  %v1972 = vpack.c.bf16 %v1913, %v1910
  %v1973 = vpack.c.bf16 %v1921, %v1918
  %v1974 = vpack.c.bf16 %v1929, %v1926
  %v1975 = vpack.c.bf16 %v1937, %v1934
  %v1976 = vpack.c.bf16 %v1945, %v1942
  %v1977 = vpack.c.bf16 %v1953, %v1950
  %v1978 = vpack.c.bf16 %v1961, %v1958
  %v1979 = vpack.c.bf16 %v1969, %v1966
  %v1988 = vunpack.c.l.b16 %v1972
  %v1989 = vunpack.c.h.b16 %v1972
  %v1990 = vunpack.c.l.b16 %v1973
  %v1991 = vunpack.c.h.b16 %v1973
  %v1992 = vunpack.c.l.b16 %v1974
  %v1993 = vunpack.c.h.b16 %v1974
  %v1994 = vunpack.c.l.b16 %v1975
  %v1995 = vunpack.c.h.b16 %v1975
  %v1996 = vunpack.c.l.b16 %v1976
  %v1997 = vunpack.c.h.b16 %v1976
  %v1998 = vunpack.c.l.b16 %v1977
  %v1999 = vunpack.c.h.b16 %v1977
  %v2000 = vunpack.c.l.b16 %v1978
  %v2001 = vunpack.c.h.b16 %v1978
  %v2002 = vunpack.c.l.b16 %v1979
  %v2003 = vunpack.c.h.b16 %v1979
  %v2004 = vpack.c.b16 %v1988, %v1988
  %v2005 = vpack.c.b16 %v1989, %v1989
  %v2006 = vpack.c.b16 %v1990, %v1990
  %v2007 = vpack.c.b16 %v1991, %v1991
  %v2008 = vpack.c.b16 %v1992, %v1992
  %v2009 = vpack.c.b16 %v1993, %v1993
  %v2010 = vpack.c.b16 %v1994, %v1994
  %v2011 = vpack.c.b16 %v1995, %v1995
  %v2012 = vpack.c.b16 %v1996, %v1996
  %v2013 = vpack.c.b16 %v1997, %v1997
  %v2014 = vpack.c.b16 %v1998, %v1998
  %v2015 = vpack.c.b16 %v1999, %v1999
  %v2016 = vpack.c.b16 %v2000, %v2000
  %v2017 = vpack.c.b16 %v2001, %v2001
  %v2018 = vpack.c.b16 %v2002, %v2002
  %v2019 = vpack.c.b16 %v2003, %v2003
  %2036 = vst [vmem:[%s4] sm:$0xf] %v2004
  %2037 = vst [vmem:[%s4 + $0x4] sm:$0xf] %v2005
  %2038 = vst [vmem:[%s4 + $0x8] sm:$0xf] %v2006
  %2039 = vst [vmem:[%s4 + $0xc] sm:$0xf] %v2007
  %2040 = vst [vmem:[%s4 + $0x10] sm:$0xf] %v2008
  %2041 = vst [vmem:[%s4 + $0x14] sm:$0xf] %v2009
  %2042 = vst [vmem:[%s4 + $0x18] sm:$0xf] %v2010
  %2043 = vst [vmem:[%s4 + $0x1c] sm:$0xf] %v2011
  %2044 = vst [vmem:[%s4 + $0x20] sm:$0xf] %v2012
  %2045 = vst [vmem:[%s4 + $0x24] sm:$0xf] %v2013
  %2046 = vst [vmem:[%s4 + $0x28] sm:$0xf] %v2014
  %2047 = vst [vmem:[%s4 + $0x2c] sm:$0xf] %v2015
  %2048 = vst [vmem:[%s4 + $0x30] sm:$0xf] %v2016
  %2049 = vst [vmem:[%s4 + $0x34] sm:$0xf] %v2017
  %2050 = vst [vmem:[%s4 + $0x38] sm:$0xf] %v2018
  %2051 = vst [vmem:[%s4 + $0x3c] sm:$0xf] %v2019
  // Predicated region
  $region18: #{gnn_embeds_forward.1} parent=0 // pred_check
    _
  $region19: #{gnn_embeds_forward.1} parent=0 // pred_check_branch
    %2053 = sbr.rel (0) target = $region21
  $region20: #{gnn_embeds_forward.1} parent=0 // pred_region
    _
  $region21: #{gnn_embeds_forward.1} parent=0 // pred_fallthru
    _
  // Predicated region
  $region22: #{gnn_embeds_forward.1} parent=0 // pred_check
    _
  $region23: #{gnn_embeds_forward.1} parent=0 // pred_check_branch
    %2055 = sbr.rel (0) target = $region25
  $region24: #{gnn_embeds_forward.1} parent=0 // pred_region
    _
  $region25: #{gnn_embeds_forward.1} parent=0 // pred_fallthru
    _

</llo_original>
